<compile_context>
chip_gen: v5e
topology: v5e:2x2
jax: 0.10.0
libtpu: 0.0.40
codegen_flags: <defaults>
</compile_context>

<pallas_src>
import math
import functools

import jax
import jax.numpy as jnp
from jax.experimental import pallas as pl
from jax.experimental.pallas import tpu as pltpu

CONTEXT_LENGTH = 16
MAX_GRANULARITY_DAYS = 32
LN_EPS = 1e-5
LANE = 128


# ----------------------------------------------------------------------------
# Fused Pallas kernel: one grid step per encoder layer, x carried in VMEM.
# ----------------------------------------------------------------------------
def _weatherformer_kernel(
    w_ref, temb_ref, fmask_ref, pe_ref, kbias_ref,          # layer-0 inputs
    win_ref, bin_ref,                                        # in_proj
    wqkv_ref, bqkv_ref, wo_ref, bo_ref,                      # attention (stacked on L)
    ln1w_ref, ln1b_ref,
    w1_ref, b1_ref, w2_ref, b2_ref,                          # FFN (stacked on L)
    ln2w_ref, ln2b_ref,
    wout_ref, bout_ref,                                      # out_proj (lane padded)
    o_ref,                                                   # (M, O_pad) output
    x_sc, qkv_sc, ctx_sc,                                    # VMEM scratch
    *, batch, seq, num_heads, head_dim):
  layer = pl.program_id(0)
  num_layers = pl.num_programs(0)
  d_model = num_heads * head_dim
  scale = 1.0 / math.sqrt(head_dim)

  # ---- layer 0: temporal-embedding add + feature mask + in_proj + pos-enc ----
  @pl.when(layer == 0)
  def _():
    x0 = (w_ref[...] + temb_ref[...]) * fmask_ref[...]                 # (M, F)
    y = jnp.dot(x0, win_ref[...], preferred_element_type=jnp.float32)  # (M, D)
    x_sc[...] = y + bin_ref[...] + pe_ref[...]

  x = x_sc[...]                                                        # (M, D)
  kbias = kbias_ref[...]                                               # (B, 1, S)

  # ---- fused full-width QKV projection on the (B*S, D) slab ----
  qkv_sc[...] = (jnp.dot(x, wqkv_ref[0], preferred_element_type=jnp.float32)
                 + bqkv_ref[0])                                        # (M, 3D)

  # ---- per-head attention (batched over B via einsum) ----
  for h in range(num_heads):
    lo = h * head_dim
    qh = qkv_sc[:, lo:lo + head_dim].reshape(batch, seq, head_dim)
    kh = qkv_sc[:, d_model + lo:d_model + lo + head_dim].reshape(
        batch, seq, head_dim)
    vh = qkv_sc[:, 2 * d_model + lo:2 * d_model + lo + head_dim].reshape(
        batch, seq, head_dim)
    s = jnp.einsum('bqd,bkd->bqk', qh, kh,
                   preferred_element_type=jnp.float32) * scale + kbias  # (B,S,S)
    m = jnp.max(s, axis=-1, keepdims=True)
    p = jnp.exp(s - m)
    a = p * pl.reciprocal(jnp.sum(p, axis=-1, keepdims=True), approx=True)
    ctx_h = jnp.einsum('bqk,bkd->bqd', a, vh,
                       preferred_element_type=jnp.float32)              # (B,S,Dh)
    ctx_sc[:, lo:lo + head_dim] = ctx_h.reshape(batch * seq, head_dim)

  # ---- single full-width attention output projection ----
  attn = (jnp.dot(ctx_sc[...], wo_ref[0], preferred_element_type=jnp.float32)
          + bo_ref[0])                                                  # (M, D)

  # ---- residual + LayerNorm1 (post-norm) ----
  x1 = x + attn
  mu = jnp.mean(x1, axis=-1, keepdims=True)
  var = jnp.mean((x1 - mu) ** 2, axis=-1, keepdims=True)
  x1 = (x1 - mu) * jax.lax.rsqrt(var + LN_EPS) * ln1w_ref[0] + ln1b_ref[0]

  # ---- feed-forward (ReLU) ----
  h1 = jnp.maximum(
      jnp.dot(x1, w1_ref[0], preferred_element_type=jnp.float32) + b1_ref[0],
      0.0)
  ff = jnp.dot(h1, w2_ref[0], preferred_element_type=jnp.float32) + b2_ref[0]

  # ---- residual + LayerNorm2 ----
  x2 = x1 + ff
  mu2 = jnp.mean(x2, axis=-1, keepdims=True)
  var2 = jnp.mean((x2 - mu2) ** 2, axis=-1, keepdims=True)
  x2 = (x2 - mu2) * jax.lax.rsqrt(var2 + LN_EPS) * ln2w_ref[0] + ln2b_ref[0]
  x_sc[...] = x2

  # ---- last layer: lane-dense (padded) output projection ----
  @pl.when(layer == num_layers - 1)
  def _():
    o_ref[...] = (jnp.dot(x2, wout_ref[...], preferred_element_type=jnp.float32)
                  + bout_ref[...])


# ----------------------------------------------------------------------------
# pallas_call wrapper
# ----------------------------------------------------------------------------
def _const_spec(shape):
  n = len(shape)
  return pl.BlockSpec(shape, lambda l, n=n: (0,) * n)


def _layer_spec(per_layer_shape):
  n = len(per_layer_shape) + 1
  return pl.BlockSpec((1,) + tuple(per_layer_shape),
                      lambda l, n=n: (l,) + (0,) * (n - 1))


def weatherformer_pallas(params, weather_rows, temb_rows, feat_mask, pe_rows,
                         kbias, num_heads):
  M, F = weather_rows.shape
  D = params["in_proj_w_t"].shape[1]
  L, _, Dff = params["w1_t"].shape
  B = kbias.shape[0]
  S = M // B
  Dh = D // num_heads
  Opad = params["out_proj_w_t_pad"].shape[1]

  kernel = functools.partial(_weatherformer_kernel, batch=B, seq=S,
                             num_heads=num_heads, head_dim=Dh)
  return pl.pallas_call(
      kernel,
      out_shape=jax.ShapeDtypeStruct((M, Opad), jnp.float32),
      grid=(L,),
      in_specs=[
          _const_spec((M, F)),        # weather rows (B*S, F)
          _const_spec((M, F)),        # temporal embedding rows
          _const_spec((1, F)),        # feature mask
          _const_spec((M, D)),        # positional encoding rows
          _const_spec((B, 1, S)),     # key-padding additive bias
          _const_spec((F, D)),        # in_proj weight (transposed)
          _const_spec((1, D)),        # in_proj bias
          _layer_spec((D, 3 * D)),    # fused qkv weight
          _layer_spec((1, 3 * D)),    # fused qkv bias
          _layer_spec((D, D)),        # attention out-proj weight
          _layer_spec((1, D)),        # attention out-proj bias
          _layer_spec((1, D)),        # ln1 weight
          _layer_spec((1, D)),        # ln1 bias
          _layer_spec((D, Dff)),      # ffn linear1 weight
          _layer_spec((1, Dff)),      # ffn linear1 bias
          _layer_spec((Dff, D)),      # ffn linear2 weight
          _layer_spec((1, D)),        # ffn linear2 bias
          _layer_spec((1, D)),        # ln2 weight
          _layer_spec((1, D)),        # ln2 bias
          _const_spec((D, Opad)),     # out_proj weight (lane padded)
          _const_spec((1, Opad)),     # out_proj bias (lane padded)
      ],
      out_specs=pl.BlockSpec((M, Opad), lambda l: (0, 0)),
      scratch_shapes=[
          pltpu.VMEM((M, D), jnp.float32),       # resident hidden state x
          pltpu.VMEM((M, 3 * D), jnp.float32),   # fused qkv
          pltpu.VMEM((M, D), jnp.float32),       # concatenated head contexts
      ],
      compiler_params=pltpu.CompilerParams(
          dimension_semantics=("arbitrary",)),
  )(weather_rows, temb_rows, feat_mask, pe_rows, kbias,
    params["in_proj_w_t"], params["in_proj_b"],
    params["wqkv_t"], params["bqkv"], params["wo_t"], params["bo"],
    params["ln1w"], params["ln1b"], params["w1_t"], params["b1"],
    params["w2_t"], params["b2"], params["ln2w"], params["ln2b"],
    params["out_proj_w_t_pad"], params["out_proj_b_pad"])


# ----------------------------------------------------------------------------
# WF positional encoding (setup glue, pure JAX trig)
# ----------------------------------------------------------------------------
def wf_positional_encoding(coords, seq_len, d_model):
  assert d_model % 4 == 0
  B = coords.shape[0]
  q = d_model // 4
  div_term = jnp.exp(jnp.arange(0, d_model, 4, dtype=jnp.float32)
                     * (-math.log(10000.0) / d_model))                # (q,)
  lat = coords[:, :1] / 180.0 * math.pi                               # (B, 1)
  lon = coords[:, 1:2] / 180.0 * math.pi                              # (B, 1)
  pos = jnp.arange(seq_len, dtype=jnp.float32)[:, None]               # (S, 1)
  tf = pos * div_term[None, :]                                        # (S, q)
  sin_tf = jnp.broadcast_to(jnp.sin(tf)[None], (B, seq_len, q))       # idx 4k+0
  cos_tf = jnp.broadcast_to(jnp.cos(tf)[None], (B, seq_len, q))       # idx 4k+1
  sin_lat = jnp.broadcast_to(jnp.sin(lat * div_term)[:, None, :],
                             (B, seq_len, q))                         # idx 4k+2
  cos_lon = jnp.broadcast_to(jnp.cos(lon * div_term)[:, None, :],
                             (B, seq_len, q))                         # idx 4k+3
  pe = jnp.stack([sin_tf, cos_tf, sin_lat, cos_lon], axis=-1)         # (B,S,q,4)
  return pe.reshape(B, seq_len, d_model)


# ----------------------------------------------------------------------------
# Parameters (deterministic synthetic init, matching nn.Module shapes),
# pre-transposed, per-layer weights stacked on a leading L axis.
# ----------------------------------------------------------------------------
def init_params(key, input_dim, output_dim, num_heads, num_layers,
                hidden_dim_factor):
  D = hidden_dim_factor * num_heads
  Dff = 4 * D
  keys = iter(jax.random.split(key, 5 + 8 * num_layers))

  def rnd(shape, scale=0.05):
    return jax.random.normal(next(keys), shape, jnp.float32) * scale

  params = {}
  emb = rnd((MAX_GRANULARITY_DAYS, input_dim), 0.1)
  params["input_scaler"] = emb.at[0].set(0.0)                 # padding_idx=0
  params["in_proj_w_t"] = rnd((D, input_dim)).T               # (F, D)
  params["in_proj_b"] = rnd((1, D), 0.01)

  wqkv, bqkv, wo, bo = [], [], [], []
  ln1w, ln1b, w1, b1, w2, b2, ln2w, ln2b = [], [], [], [], [], [], [], []
  for _ in range(num_layers):
    in_w = rnd((3 * D, D))                  # PyTorch MHA in_proj_weight
    in_b = rnd((3 * D,), 0.01)
    wqkv.append(in_w.T)                     # (D, 3D) columns = [q | k | v]
    bqkv.append(in_b.reshape(1, 3 * D))
    wo.append(rnd((D, D)).T)                # out_proj.weight -> (D, D)
    bo.append(rnd((1, D), 0.01))
    ln1w.append(jnp.ones((1, D), jnp.float32))
    ln1b.append(jnp.zeros((1, D), jnp.float32))
    w1.append(rnd((Dff, D)).T)              # linear1 -> (D, Dff)
    b1.append(rnd((1, Dff), 0.01))
    w2.append(rnd((D, Dff)).T)              # linear2 -> (Dff, D)
    b2.append(rnd((1, D), 0.01))
    ln2w.append(jnp.ones((1, D), jnp.float32))
    ln2b.append(jnp.zeros((1, D), jnp.float32))

  params["wqkv_t"] = jnp.stack(wqkv)        # (L, D, 3D)
  params["bqkv"] = jnp.stack(bqkv)          # (L, 1, 3D)
  params["wo_t"] = jnp.stack(wo)            # (L, D, D)
  params["bo"] = jnp.stack(bo)              # (L, 1, D)
  params["ln1w"] = jnp.stack(ln1w)
  params["ln1b"] = jnp.stack(ln1b)
  params["w1_t"] = jnp.stack(w1)            # (L, D, Dff)
  params["b1"] = jnp.stack(b1)              # (L, 1, Dff)
  params["w2_t"] = jnp.stack(w2)            # (L, Dff, D)
  params["b2"] = jnp.stack(b2)              # (L, 1, D)
  params["ln2w"] = jnp.stack(ln2w)
  params["ln2b"] = jnp.stack(ln2b)

  # out_proj, zero-padded to a lane-dense 128-wide slab
  Opad = ((output_dim + LANE - 1) // LANE) * LANE
  wout_t = rnd((output_dim, D)).T           # (D, O)
  bout = rnd((1, output_dim), 0.01)
  params["out_proj_w_t_pad"] = jnp.zeros((D, Opad), jnp.float32).at[
      :, :output_dim].set(wout_t)
  params["out_proj_b_pad"] = jnp.zeros((1, Opad), jnp.float32).at[
      :, :output_dim].set(bout)
  params["out_dim"] = output_dim
  return params


# ----------------------------------------------------------------------------
# Forward pass
# ----------------------------------------------------------------------------
def weatherformer_forward(params, weather, coords, temporal_index,
                          weather_feature_mask=None, src_key_padding_mask=None,
                          num_heads=4):
  B, S, F = weather.shape
  D = params["in_proj_w_t"].shape[1]
  M = B * S
  O = params["out_dim"]

  # input_scaler embedding lookup (gather glue) -> added inside the kernel
  gran = temporal_index[:, 1].astype(jnp.int32)
  temp_emb = params["input_scaler"][gran]                         # (B, F)
  temb_rows = jnp.broadcast_to(temp_emb[:, None, :], (B, S, F)).reshape(M, F)

  if weather_feature_mask is None:
    feat_mask = jnp.ones((1, F), jnp.float32)
  else:
    m = weather_feature_mask
    if m.ndim > 1:
      m = m[0]
    feat_mask = jnp.where(m, 0.0, 1.0).reshape(1, F).astype(jnp.float32)

  pe_rows = wf_positional_encoding(coords, S, D).reshape(M, D)

  if src_key_padding_mask is None:
    kbias = jnp.zeros((B, 1, S), jnp.float32)
  else:
    kbias = jnp.where(src_key_padding_mask, -1e9, 0.0).reshape(
        B, 1, S).astype(jnp.float32)

  out_pad = weatherformer_pallas(params, weather.reshape(M, F), temb_rows,
                                 feat_mask, pe_rows, kbias, num_heads)
  return out_pad[:, :O].reshape(B, S, O)
  # TODO(synk): dropout layers are treated as eval-mode identity (no RNG dropout).


# ----------------------------------------------------------------------------
if __name__ == "__main__":
  B, S = 2, 8
  input_dim, output_dim = 8, 8
  num_heads, num_layers, hidden_dim_factor = 4, 2, 8   # hidden_dim=32, ff=128

  key = jax.random.PRNGKey(0)
  k1, k2, k3 = jax.random.split(key, 3)
  weather = jax.random.normal(k1, (B, S, input_dim), jnp.float32)
  coords = jax.random.uniform(k2, (B, 2), jnp.float32, minval=-90.0, maxval=90.0)
  temporal_index = jnp.stack(
      [jnp.zeros((B,), jnp.int32),
       jax.random.randint(k3, (B,), 1, MAX_GRANULARITY_DAYS)], axis=1)

  params = init_params(jax.random.PRNGKey(42), input_dim, output_dim,
                       num_heads, num_layers, hidden_dim_factor)

  out = weatherformer_forward(params, weather, coords, temporal_index,
                              num_heads=num_heads)
  out = jax.block_until_ready(out)

  assert out.shape == (B, S, output_dim), out.shape
  assert bool(jnp.all(jnp.isfinite(out)))
  print("KERNEL_OK")
</pallas_src>

<mosaic_0001>
module attributes {stable_mosaic.version = 11 : i64} {
  func.func @_weatherformer_kernel(%arg0: i32, %arg1: memref<16x8xf32, #tpu.memory_space<vmem>>, %arg2: memref<16x8xf32, #tpu.memory_space<vmem>>, %arg3: memref<1x8xf32, #tpu.memory_space<vmem>>, %arg4: memref<16x32xf32, #tpu.memory_space<vmem>>, %arg5: memref<2x1x8xf32, #tpu.memory_space<vmem>>, %arg6: memref<8x32xf32, #tpu.memory_space<vmem>>, %arg7: memref<1x32xf32, #tpu.memory_space<vmem>>, %arg8: memref<1x32x96xf32, #tpu.memory_space<vmem>>, %arg9: memref<1x1x96xf32, #tpu.memory_space<vmem>>, %arg10: memref<1x32x32xf32, #tpu.memory_space<vmem>>, %arg11: memref<1x1x32xf32, #tpu.memory_space<vmem>>, %arg12: memref<1x1x32xf32, #tpu.memory_space<vmem>>, %arg13: memref<1x1x32xf32, #tpu.memory_space<vmem>>, %arg14: memref<1x32x128xf32, #tpu.memory_space<vmem>>, %arg15: memref<1x1x128xf32, #tpu.memory_space<vmem>>, %arg16: memref<1x128x32xf32, #tpu.memory_space<vmem>>, %arg17: memref<1x1x32xf32, #tpu.memory_space<vmem>>, %arg18: memref<1x1x32xf32, #tpu.memory_space<vmem>>, %arg19: memref<1x1x32xf32, #tpu.memory_space<vmem>>, %arg20: memref<32x128xf32, #tpu.memory_space<vmem>>, %arg21: memref<1x128xf32, #tpu.memory_space<vmem>>, %arg22: memref<16x128xf32, #tpu.memory_space<vmem>>, %arg23: memref<16x32xf32, #tpu.memory_space<vmem>>, %arg24: memref<16x96xf32, #tpu.memory_space<vmem>>, %arg25: memref<16x32xf32, #tpu.memory_space<vmem>>) attributes {dimension_semantics = [#tpu.dimension_semantics<arbitrary>], iteration_bounds = array<i64: 2>, scalar_prefetch = 0 : i64, scratch_operands = 3 : i64, tpu.core_type = #tpu.core_type<tc>, window_params = [{pipeline_mode = #tpu.pipeline_mode<synchronous>, transform_indices = @transform_0, window_bounds = array<i64: 16, 8>}, {pipeline_mode = #tpu.pipeline_mode<synchronous>, transform_indices = @transform_1, window_bounds = array<i64: 16, 8>}, {pipeline_mode = #tpu.pipeline_mode<synchronous>, transform_indices = @transform_2, window_bounds = array<i64: 1, 8>}, {pipeline_mode = #tpu.pipeline_mode<synchronous>, transform_indices = @transform_3, window_bounds = array<i64: 16, 32>}, {pipeline_mode = #tpu.pipeline_mode<synchronous>, transform_indices = @transform_4, window_bounds = array<i64: 2, 1, 8>}, {pipeline_mode = #tpu.pipeline_mode<synchronous>, transform_indices = @transform_5, window_bounds = array<i64: 8, 32>}, {pipeline_mode = #tpu.pipeline_mode<synchronous>, transform_indices = @transform_6, window_bounds = array<i64: 1, 32>}, {transform_indices = @transform_7, window_bounds = array<i64: 1, 32, 96>}, {transform_indices = @transform_8, window_bounds = array<i64: 1, 1, 96>}, {transform_indices = @transform_9, window_bounds = array<i64: 1, 32, 32>}, {transform_indices = @transform_10, window_bounds = array<i64: 1, 1, 32>}, {transform_indices = @transform_11, window_bounds = array<i64: 1, 1, 32>}, {transform_indices = @transform_12, window_bounds = array<i64: 1, 1, 32>}, {transform_indices = @transform_13, window_bounds = array<i64: 1, 32, 128>}, {transform_indices = @transform_14, window_bounds = array<i64: 1, 1, 128>}, {transform_indices = @transform_15, window_bounds = array<i64: 1, 128, 32>}, {transform_indices = @transform_16, window_bounds = array<i64: 1, 1, 32>}, {transform_indices = @transform_17, window_bounds = array<i64: 1, 1, 32>}, {transform_indices = @transform_18, window_bounds = array<i64: 1, 1, 32>}, {pipeline_mode = #tpu.pipeline_mode<synchronous>, transform_indices = @transform_19, window_bounds = array<i64: 32, 128>}, {pipeline_mode = #tpu.pipeline_mode<synchronous>, transform_indices = @transform_20, window_bounds = array<i64: 1, 128>}, {pipeline_mode = #tpu.pipeline_mode<synchronous>, transform_indices = @transform_21, window_bounds = array<i64: 16, 128>}]} {
    %c0_i32 = arith.constant 0 : i32
    %0 = arith.cmpi eq, %arg0, %c0_i32 : i32
    %1 = arith.extui %0 : i1 to i32
    %c0_i32_0 = arith.constant 0 : i32
    %2 = arith.cmpi ne, %1, %c0_i32_0 : i32
    scf.if %2 {
      %c0_103 = arith.constant 0 : index
      %c0_104 = arith.constant 0 : index
      %191 = vector.load %arg1[%c0_103, %c0_104] : memref<16x8xf32, #tpu.memory_space<vmem>>, vector<16x8xf32>
      %c0_105 = arith.constant 0 : index
      %c0_106 = arith.constant 0 : index
      %192 = vector.load %arg2[%c0_105, %c0_106] : memref<16x8xf32, #tpu.memory_space<vmem>>, vector<16x8xf32>
      %193 = arith.addf %191, %192 : vector<16x8xf32>
      %c0_107 = arith.constant 0 : index
      %c0_108 = arith.constant 0 : index
      %194 = vector.load %arg3[%c0_107, %c0_108] : memref<1x8xf32, #tpu.memory_space<vmem>>, vector<1x8xf32>
      %195 = vector.broadcast %194 : vector<1x8xf32> to vector<16x8xf32>
      %196 = arith.mulf %193, %195 : vector<16x8xf32>
      %c0_109 = arith.constant 0 : index
      %c0_110 = arith.constant 0 : index
      %197 = vector.load %arg6[%c0_109, %c0_110] : memref<8x32xf32, #tpu.memory_space<vmem>>, vector<8x32xf32>
      %cst_111 = arith.constant dense<0.000000e+00> : vector<16x32xf32>
      %198 = tpu.matmul %196, %197, %cst_111 {dimension_numbers = #tpu.dot_dimension_numbers<[1], [0], [0], [1], [0, 0, 1, 1], [], []>} : vector<16x8xf32>, vector<8x32xf32>, vector<16x32xf32> -> vector<16x32xf32>
      %c0_112 = arith.constant 0 : index
      %c0_113 = arith.constant 0 : index
      %199 = vector.load %arg7[%c0_112, %c0_113] : memref<1x32xf32, #tpu.memory_space<vmem>>, vector<1x32xf32>
      %200 = vector.broadcast %199 : vector<1x32xf32> to vector<16x32xf32>
      %201 = arith.addf %198, %200 : vector<16x32xf32>
      %c0_114 = arith.constant 0 : index
      %c0_115 = arith.constant 0 : index
      %202 = vector.load %arg4[%c0_114, %c0_115] : memref<16x32xf32, #tpu.memory_space<vmem>>, vector<16x32xf32>
      %203 = arith.addf %201, %202 : vector<16x32xf32>
      %c0_116 = arith.constant 0 : index
      %c0_117 = arith.constant 0 : index
      %204 = vector.load %arg23[%c0_116, %c0_117] : memref<16x32xf32, #tpu.memory_space<vmem>>, vector<16x32xf32>
      tpu.vector_store %arg23[%c0_116, %c0_117], %203 {strides = array<i32>} : memref<16x32xf32, #tpu.memory_space<vmem>>, vector<16x32xf32>,
    } else {
    }
    %c0 = arith.constant 0 : index
    %c0_1 = arith.constant 0 : index
    %3 = vector.load %arg23[%c0, %c0_1] : memref<16x32xf32, #tpu.memory_space<vmem>>, vector<16x32xf32>
    %c0_2 = arith.constant 0 : index
    %c0_3 = arith.constant 0 : index
    %c0_4 = arith.constant 0 : index
    %4 = vector.load %arg5[%c0_2, %c0_3, %c0_4] : memref<2x1x8xf32, #tpu.memory_space<vmem>>, vector<2x1x8xf32>
    %c0_5 = arith.constant 0 : index
    %c0_6 = arith.constant 0 : index
    %c0_7 = arith.constant 0 : index
    %5 = vector.load %arg8[%c0_5, %c0_6, %c0_7] : memref<1x32x96xf32, #tpu.memory_space<vmem>>, vector<1x32x96xf32>
    %6 = vector.shape_cast %5 : vector<1x32x96xf32> to vector<32x96xf32>
    %cst = arith.constant dense<0.000000e+00> : vector<16x96xf32>
    %7 = tpu.matmul %3, %6, %cst {dimension_numbers = #tpu.dot_dimension_numbers<[1], [0], [0], [1], [0, 0, 1, 1], [], []>} : vector<16x32xf32>, vector<32x96xf32>, vector<16x96xf32> -> vector<16x96xf32>
    %c0_8 = arith.constant 0 : index
    %c0_9 = arith.constant 0 : index
    %c0_10 = arith.constant 0 : index
    %8 = vector.load %arg9[%c0_8, %c0_9, %c0_10] : memref<1x1x96xf32, #tpu.memory_space<vmem>>, vector<1x1x96xf32>
    %9 = vector.shape_cast %8 : vector<1x1x96xf32> to vector<1x96xf32>
    %10 = vector.broadcast %9 : vector<1x96xf32> to vector<16x96xf32>
    %11 = arith.addf %7, %10 : vector<16x96xf32>
    %c0_11 = arith.constant 0 : index
    %c0_12 = arith.constant 0 : index
    %12 = vector.load %arg24[%c0_11, %c0_12] : memref<16x96xf32, #tpu.memory_space<vmem>>, vector<16x96xf32>
    tpu.vector_store %arg24[%c0_11, %c0_12], %11 {strides = array<i32>} : memref<16x96xf32, #tpu.memory_space<vmem>>, vector<16x96xf32>,
    %c0_13 = arith.constant 0 : index
    %c0_14 = arith.constant 0 : index
    %13 = vector.load %arg24[%c0_13, %c0_14] : memref<16x96xf32, #tpu.memory_space<vmem>>, vector<16x8xf32>
    %14 = vector.shape_cast %13 : vector<16x8xf32> to vector<2x8x8xf32>
    %c0_15 = arith.constant 0 : index
    %c32 = arith.constant 32 : index
    %15 = vector.load %arg24[%c0_15, %c32] : memref<16x96xf32, #tpu.memory_space<vmem>>, vector<16x8xf32>
    %16 = vector.shape_cast %15 : vector<16x8xf32> to vector<2x8x8xf32>
    %c0_16 = arith.constant 0 : index
    %c64 = arith.constant 64 : index
    %17 = vector.load %arg24[%c0_16, %c64] : memref<16x96xf32, #tpu.memory_space<vmem>>, vector<16x8xf32>
    %18 = vector.shape_cast %17 : vector<16x8xf32> to vector<2x8x8xf32>
    "tpu.trace_start"() <{level = 10 : i32, message = "bqd,bkd->bqk"}> : () -> ()
    %cst_17 = arith.constant dense<0.000000e+00> : vector<2x8x8xf32>
    %19 = tpu.matmul %14, %16, %cst_17 {dimension_numbers = #tpu.dot_dimension_numbers<[2], [2], [1], [1], [0, 0, 0, 1, 1, 1], [0], [0]>} : vector<2x8x8xf32>, vector<2x8x8xf32>, vector<2x8x8xf32> -> vector<2x8x8xf32>
    "tpu.trace_stop"() : () -> ()
    %cst_18 = arith.constant 0.353553385 : f32
    %20 = vector.broadcast %cst_18 : f32 to vector<2x8x8xf32>
    %21 = arith.mulf %19, %20 : vector<2x8x8xf32>
    %22 = vector.broadcast %4 : vector<2x1x8xf32> to vector<2x8x8xf32>
    %23 = arith.addf %21, %22 : vector<2x8x8xf32>
    %cst_19 = arith.constant dense<0xFF800000> : vector<2x8xf32>
    %24 = vector.multi_reduction <maximumf>, %23, %cst_19 [2] : vector<2x8x8xf32> to vector<2x8xf32>
    %25 = vector.shape_cast %24 : vector<2x8xf32> to vector<2x8x1xf32>
    %26 = vector.broadcast %25 : vector<2x8x1xf32> to vector<2x8x8xf32>
    %27 = arith.subf %23, %26 : vector<2x8x8xf32>
    %28 = math.exp %27 : vector<2x8x8xf32>
    %cst_20 = arith.constant dense<0.000000e+00> : vector<2x8xf32>
    %29 = vector.multi_reduction <add>, %28, %cst_20 [2] : vector<2x8x8xf32> to vector<2x8xf32>
    %30 = vector.shape_cast %29 : vector<2x8xf32> to vector<2x8x1xf32>
    %31 = tpu.reciprocal %30 {approx = true} : vector<2x8x1xf32> -> vector<2x8x1xf32>
    %32 = vector.broadcast %31 : vector<2x8x1xf32> to vector<2x8x8xf32>
    %33 = arith.mulf %28, %32 : vector<2x8x8xf32>
    "tpu.trace_start"() <{level = 10 : i32, message = "bqk,bkd->bqd"}> : () -> ()
    %cst_21 = arith.constant dense<0.000000e+00> : vector<2x8x8xf32>
    %34 = tpu.matmul %33, %18, %cst_21 {dimension_numbers = #tpu.dot_dimension_numbers<[2], [1], [1], [2], [0, 0, 0, 1, 1, 2], [0], [0]>} : vector<2x8x8xf32>, vector<2x8x8xf32>, vector<2x8x8xf32> -> vector<2x8x8xf32>
    "tpu.trace_stop"() : () -> ()
    %35 = vector.shape_cast %34 : vector<2x8x8xf32> to vector<16x8xf32>
    %c0_22 = arith.constant 0 : index
    %c0_23 = arith.constant 0 : index
    %36 = vector.load %arg25[%c0_22, %c0_23] : memref<16x32xf32, #tpu.memory_space<vmem>>, vector<16x8xf32>
    tpu.vector_store %arg25[%c0_22, %c0_23], %35 {strides = array<i32>} : memref<16x32xf32, #tpu.memory_space<vmem>>, vector<16x8xf32>,
    %c0_24 = arith.constant 0 : index
    %c8 = arith.constant 8 : index
    %37 = vector.load %arg24[%c0_24, %c8] : memref<16x96xf32, #tpu.memory_space<vmem>>, vector<16x8xf32>
    %38 = vector.shape_cast %37 : vector<16x8xf32> to vector<2x8x8xf32>
    %c0_25 = arith.constant 0 : index
    %c40 = arith.constant 40 : index
    %39 = vector.load %arg24[%c0_25, %c40] : memref<16x96xf32, #tpu.memory_space<vmem>>, vector<16x8xf32>
    %40 = vector.shape_cast %39 : vector<16x8xf32> to vector<2x8x8xf32>
    %c0_26 = arith.constant 0 : index
    %c72 = arith.constant 72 : index
    %41 = vector.load %arg24[%c0_26, %c72] : memref<16x96xf32, #tpu.memory_space<vmem>>, vector<16x8xf32>
    %42 = vector.shape_cast %41 : vector<16x8xf32> to vector<2x8x8xf32>
    "tpu.trace_start"() <{level = 10 : i32, message = "bqd,bkd->bqk"}> : () -> ()
    %cst_27 = arith.constant dense<0.000000e+00> : vector<2x8x8xf32>
    %43 = tpu.matmul %38, %40, %cst_27 {dimension_numbers = #tpu.dot_dimension_numbers<[2], [2], [1], [1], [0, 0, 0, 1, 1, 1], [0], [0]>} : vector<2x8x8xf32>, vector<2x8x8xf32>, vector<2x8x8xf32> -> vector<2x8x8xf32>
    "tpu.trace_stop"() : () -> ()
    %cst_28 = arith.constant 0.353553385 : f32
    %44 = vector.broadcast %cst_28 : f32 to vector<2x8x8xf32>
    %45 = arith.mulf %43, %44 : vector<2x8x8xf32>
    %46 = vector.broadcast %4 : vector<2x1x8xf32> to vector<2x8x8xf32>
    %47 = arith.addf %45, %46 : vector<2x8x8xf32>
    %cst_29 = arith.constant dense<0xFF800000> : vector<2x8xf32>
    %48 = vector.multi_reduction <maximumf>, %47, %cst_29 [2] : vector<2x8x8xf32> to vector<2x8xf32>
    %49 = vector.shape_cast %48 : vector<2x8xf32> to vector<2x8x1xf32>
    %50 = vector.broadcast %49 : vector<2x8x1xf32> to vector<2x8x8xf32>
    %51 = arith.subf %47, %50 : vector<2x8x8xf32>
    %52 = math.exp %51 : vector<2x8x8xf32>
    %cst_30 = arith.constant dense<0.000000e+00> : vector<2x8xf32>
    %53 = vector.multi_reduction <add>, %52, %cst_30 [2] : vector<2x8x8xf32> to vector<2x8xf32>
    %54 = vector.shape_cast %53 : vector<2x8xf32> to vector<2x8x1xf32>
    %55 = tpu.reciprocal %54 {approx = true} : vector<2x8x1xf32> -> vector<2x8x1xf32>
    %56 = vector.broadcast %55 : vector<2x8x1xf32> to vector<2x8x8xf32>
    %57 = arith.mulf %52, %56 : vector<2x8x8xf32>
    "tpu.trace_start"() <{level = 10 : i32, message = "bqk,bkd->bqd"}> : () -> ()
    %cst_31 = arith.constant dense<0.000000e+00> : vector<2x8x8xf32>
    %58 = tpu.matmul %57, %42, %cst_31 {dimension_numbers = #tpu.dot_dimension_numbers<[2], [1], [1], [2], [0, 0, 0, 1, 1, 2], [0], [0]>} : vector<2x8x8xf32>, vector<2x8x8xf32>, vector<2x8x8xf32> -> vector<2x8x8xf32>
    "tpu.trace_stop"() : () -> ()
    %59 = vector.shape_cast %58 : vector<2x8x8xf32> to vector<16x8xf32>
    %c0_32 = arith.constant 0 : index
    %c8_33 = arith.constant 8 : index
    %60 = vector.load %arg25[%c0_32, %c8_33] : memref<16x32xf32, #tpu.memory_space<vmem>>, vector<16x8xf32>
    tpu.vector_store %arg25[%c0_32, %c8_33], %59 {strides = array<i32>} : memref<16x32xf32, #tpu.memory_space<vmem>>, vector<16x8xf32>,
    %c0_34 = arith.constant 0 : index
    %c16 = arith.constant 16 : index
    %61 = vector.load %arg24[%c0_34, %c16] : memref<16x96xf32, #tpu.memory_space<vmem>>, vector<16x8xf32>
    %62 = vector.shape_cast %61 : vector<16x8xf32> to vector<2x8x8xf32>
    %c0_35 = arith.constant 0 : index
    %c48 = arith.constant 48 : index
    %63 = vector.load %arg24[%c0_35, %c48] : memref<16x96xf32, #tpu.memory_space<vmem>>, vector<16x8xf32>
    %64 = vector.shape_cast %63 : vector<16x8xf32> to vector<2x8x8xf32>
    %c0_36 = arith.constant 0 : index
    %c80 = arith.constant 80 : index
    %65 = vector.load %arg24[%c0_36, %c80] : memref<16x96xf32, #tpu.memory_space<vmem>>, vector<16x8xf32>
    %66 = vector.shape_cast %65 : vector<16x8xf32> to vector<2x8x8xf32>
    "tpu.trace_start"() <{level = 10 : i32, message = "bqd,bkd->bqk"}> : () -> ()
    %cst_37 = arith.constant dense<0.000000e+00> : vector<2x8x8xf32>
    %67 = tpu.matmul %62, %64, %cst_37 {dimension_numbers = #tpu.dot_dimension_numbers<[2], [2], [1], [1], [0, 0, 0, 1, 1, 1], [0], [0]>} : vector<2x8x8xf32>, vector<2x8x8xf32>, vector<2x8x8xf32> -> vector<2x8x8xf32>
    "tpu.trace_stop"() : () -> ()
    %cst_38 = arith.constant 0.353553385 : f32
    %68 = vector.broadcast %cst_38 : f32 to vector<2x8x8xf32>
    %69 = arith.mulf %67, %68 : vector<2x8x8xf32>
    %70 = vector.broadcast %4 : vector<2x1x8xf32> to vector<2x8x8xf32>
    %71 = arith.addf %69, %70 : vector<2x8x8xf32>
    %cst_39 = arith.constant dense<0xFF800000> : vector<2x8xf32>
    %72 = vector.multi_reduction <maximumf>, %71, %cst_39 [2] : vector<2x8x8xf32> to vector<2x8xf32>
    %73 = vector.shape_cast %72 : vector<2x8xf32> to vector<2x8x1xf32>
    %74 = vector.broadcast %73 : vector<2x8x1xf32> to vector<2x8x8xf32>
    %75 = arith.subf %71, %74 : vector<2x8x8xf32>
    %76 = math.exp %75 : vector<2x8x8xf32>
    %cst_40 = arith.constant dense<0.000000e+00> : vector<2x8xf32>
    %77 = vector.multi_reduction <add>, %76, %cst_40 [2] : vector<2x8x8xf32> to vector<2x8xf32>
    %78 = vector.shape_cast %77 : vector<2x8xf32> to vector<2x8x1xf32>
    %79 = tpu.reciprocal %78 {approx = true} : vector<2x8x1xf32> -> vector<2x8x1xf32>
    %80 = vector.broadcast %79 : vector<2x8x1xf32> to vector<2x8x8xf32>
    %81 = arith.mulf %76, %80 : vector<2x8x8xf32>
    "tpu.trace_start"() <{level = 10 : i32, message = "bqk,bkd->bqd"}> : () -> ()
    %cst_41 = arith.constant dense<0.000000e+00> : vector<2x8x8xf32>
    %82 = tpu.matmul %81, %66, %cst_41 {dimension_numbers = #tpu.dot_dimension_numbers<[2], [1], [1], [2], [0, 0, 0, 1, 1, 2], [0], [0]>} : vector<2x8x8xf32>, vector<2x8x8xf32>, vector<2x8x8xf32> -> vector<2x8x8xf32>
    "tpu.trace_stop"() : () -> ()
    %83 = vector.shape_cast %82 : vector<2x8x8xf32> to vector<16x8xf32>
    %c0_42 = arith.constant 0 : index
    %c16_43 = arith.constant 16 : index
    %84 = vector.load %arg25[%c0_42, %c16_43] : memref<16x32xf32, #tpu.memory_space<vmem>>, vector<16x8xf32>
    tpu.vector_store %arg25[%c0_42, %c16_43], %83 {strides = array<i32>} : memref<16x32xf32, #tpu.memory_space<vmem>>, vector<16x8xf32>,
    %c0_44 = arith.constant 0 : index
    %c24 = arith.constant 24 : index
    %85 = vector.load %arg24[%c0_44, %c24] : memref<16x96xf32, #tpu.memory_space<vmem>>, vector<16x8xf32>
    %86 = vector.shape_cast %85 : vector<16x8xf32> to vector<2x8x8xf32>
    %c0_45 = arith.constant 0 : index
    %c56 = arith.constant 56 : index
    %87 = vector.load %arg24[%c0_45, %c56] : memref<16x96xf32, #tpu.memory_space<vmem>>, vector<16x8xf32>
    %88 = vector.shape_cast %87 : vector<16x8xf32> to vector<2x8x8xf32>
    %c0_46 = arith.constant 0 : index
    %c88 = arith.constant 88 : index
    %89 = vector.load %arg24[%c0_46, %c88] : memref<16x96xf32, #tpu.memory_space<vmem>>, vector<16x8xf32>
    %90 = vector.shape_cast %89 : vector<16x8xf32> to vector<2x8x8xf32>
    "tpu.trace_start"() <{level = 10 : i32, message = "bqd,bkd->bqk"}> : () -> ()
    %cst_47 = arith.constant dense<0.000000e+00> : vector<2x8x8xf32>
    %91 = tpu.matmul %86, %88, %cst_47 {dimension_numbers = #tpu.dot_dimension_numbers<[2], [2], [1], [1], [0, 0, 0, 1, 1, 1], [0], [0]>} : vector<2x8x8xf32>, vector<2x8x8xf32>, vector<2x8x8xf32> -> vector<2x8x8xf32>
    "tpu.trace_stop"() : () -> ()
    %cst_48 = arith.constant 0.353553385 : f32
    %92 = vector.broadcast %cst_48 : f32 to vector<2x8x8xf32>
    %93 = arith.mulf %91, %92 : vector<2x8x8xf32>
    %94 = vector.broadcast %4 : vector<2x1x8xf32> to vector<2x8x8xf32>
    %95 = arith.addf %93, %94 : vector<2x8x8xf32>
    %cst_49 = arith.constant dense<0xFF800000> : vector<2x8xf32>
    %96 = vector.multi_reduction <maximumf>, %95, %cst_49 [2] : vector<2x8x8xf32> to vector<2x8xf32>
    %97 = vector.shape_cast %96 : vector<2x8xf32> to vector<2x8x1xf32>
    %98 = vector.broadcast %97 : vector<2x8x1xf32> to vector<2x8x8xf32>
    %99 = arith.subf %95, %98 : vector<2x8x8xf32>
    %100 = math.exp %99 : vector<2x8x8xf32>
    %cst_50 = arith.constant dense<0.000000e+00> : vector<2x8xf32>
    %101 = vector.multi_reduction <add>, %100, %cst_50 [2] : vector<2x8x8xf32> to vector<2x8xf32>
    %102 = vector.shape_cast %101 : vector<2x8xf32> to vector<2x8x1xf32>
    %103 = tpu.reciprocal %102 {approx = true} : vector<2x8x1xf32> -> vector<2x8x1xf32>
    %104 = vector.broadcast %103 : vector<2x8x1xf32> to vector<2x8x8xf32>
    %105 = arith.mulf %100, %104 : vector<2x8x8xf32>
    "tpu.trace_start"() <{level = 10 : i32, message = "bqk,bkd->bqd"}> : () -> ()
    %cst_51 = arith.constant dense<0.000000e+00> : vector<2x8x8xf32>
    %106 = tpu.matmul %105, %90, %cst_51 {dimension_numbers = #tpu.dot_dimension_numbers<[2], [1], [1], [2], [0, 0, 0, 1, 1, 2], [0], [0]>} : vector<2x8x8xf32>, vector<2x8x8xf32>, vector<2x8x8xf32> -> vector<2x8x8xf32>
    "tpu.trace_stop"() : () -> ()
    %107 = vector.shape_cast %106 : vector<2x8x8xf32> to vector<16x8xf32>
    %c0_52 = arith.constant 0 : index
    %c24_53 = arith.constant 24 : index
    %108 = vector.load %arg25[%c0_52, %c24_53] : memref<16x32xf32, #tpu.memory_space<vmem>>, vector<16x8xf32>
    tpu.vector_store %arg25[%c0_52, %c24_53], %107 {strides = array<i32>} : memref<16x32xf32, #tpu.memory_space<vmem>>, vector<16x8xf32>,
    %c0_54 = arith.constant 0 : index
    %c0_55 = arith.constant 0 : index
    %109 = vector.load %arg25[%c0_54, %c0_55] : memref<16x32xf32, #tpu.memory_space<vmem>>, vector<16x32xf32>
    %c0_56 = arith.constant 0 : index
    %c0_57 = arith.constant 0 : index
    %c0_58 = arith.constant 0 : index
    %110 = vector.load %arg10[%c0_56, %c0_57, %c0_58] : memref<1x32x32xf32, #tpu.memory_space<vmem>>, vector<1x32x32xf32>
    %111 = vector.shape_cast %110 : vector<1x32x32xf32> to vector<32x32xf32>
    %cst_59 = arith.constant dense<0.000000e+00> : vector<16x32xf32>
    %112 = tpu.matmul %109, %111, %cst_59 {dimension_numbers = #tpu.dot_dimension_numbers<[1], [0], [0], [1], [0, 0, 1, 1], [], []>} : vector<16x32xf32>, vector<32x32xf32>, vector<16x32xf32> -> vector<16x32xf32>
    %c0_60 = arith.constant 0 : index
    %c0_61 = arith.constant 0 : index
    %c0_62 = arith.constant 0 : index
    %113 = vector.load %arg11[%c0_60, %c0_61, %c0_62] : memref<1x1x32xf32, #tpu.memory_space<vmem>>, vector<1x1x32xf32>
    %114 = vector.shape_cast %113 : vector<1x1x32xf32> to vector<1x32xf32>
    %115 = vector.broadcast %114 : vector<1x32xf32> to vector<16x32xf32>
    %116 = arith.addf %112, %115 : vector<16x32xf32>
    %117 = arith.addf %3, %116 : vector<16x32xf32>
    %cst_63 = arith.constant dense<0.000000e+00> : vector<16xf32>
    %118 = vector.multi_reduction <add>, %117, %cst_63 [1] : vector<16x32xf32> to vector<16xf32>
    %119 = vector.shape_cast %118 : vector<16xf32> to vector<16x1xf32>
    %cst_64 = arith.constant 3.200000e+01 : f32
    %120 = vector.broadcast %cst_64 : f32 to vector<16x1xf32>
    %121 = arith.divf %119, %120 : vector<16x1xf32>
    %122 = vector.broadcast %121 : vector<16x1xf32> to vector<16x32xf32>
    %123 = arith.subf %117, %122 : vector<16x32xf32>
    %124 = arith.mulf %123, %123 : vector<16x32xf32>
    %cst_65 = arith.constant dense<0.000000e+00> : vector<16xf32>
    %125 = vector.multi_reduction <add>, %124, %cst_65 [1] : vector<16x32xf32> to vector<16xf32>
    %126 = vector.shape_cast %125 : vector<16xf32> to vector<16x1xf32>
    %cst_66 = arith.constant 3.200000e+01 : f32
    %127 = vector.broadcast %cst_66 : f32 to vector<16x1xf32>
    %128 = arith.divf %126, %127 : vector<16x1xf32>
    %129 = vector.broadcast %121 : vector<16x1xf32> to vector<16x32xf32>
    %130 = arith.subf %117, %129 : vector<16x32xf32>
    %cst_67 = arith.constant 9.99999974E-6 : f32
    %131 = vector.broadcast %cst_67 : f32 to vector<16x1xf32>
    %132 = arith.addf %128, %131 : vector<16x1xf32>
    %133 = math.rsqrt %132 : vector<16x1xf32>
    %134 = vector.broadcast %133 : vector<16x1xf32> to vector<16x32xf32>
    %135 = arith.mulf %130, %134 : vector<16x32xf32>
    %c0_68 = arith.constant 0 : index
    %c0_69 = arith.constant 0 : index
    %c0_70 = arith.constant 0 : index
    %136 = vector.load %arg12[%c0_68, %c0_69, %c0_70] : memref<1x1x32xf32, #tpu.memory_space<vmem>>, vector<1x1x32xf32>
    %137 = vector.shape_cast %136 : vector<1x1x32xf32> to vector<1x32xf32>
    %138 = vector.broadcast %137 : vector<1x32xf32> to vector<16x32xf32>
    %139 = arith.mulf %135, %138 : vector<16x32xf32>
    %c0_71 = arith.constant 0 : index
    %c0_72 = arith.constant 0 : index
    %c0_73 = arith.constant 0 : index
    %140 = vector.load %arg13[%c0_71, %c0_72, %c0_73] : memref<1x1x32xf32, #tpu.memory_space<vmem>>, vector<1x1x32xf32>
    %141 = vector.shape_cast %140 : vector<1x1x32xf32> to vector<1x32xf32>
    %142 = vector.broadcast %141 : vector<1x32xf32> to vector<16x32xf32>
    %143 = arith.addf %139, %142 : vector<16x32xf32>
    %c0_74 = arith.constant 0 : index
    %c0_75 = arith.constant 0 : index
    %c0_76 = arith.constant 0 : index
    %144 = vector.load %arg14[%c0_74, %c0_75, %c0_76] : memref<1x32x128xf32, #tpu.memory_space<vmem>>, vector<1x32x128xf32>
    %145 = vector.shape_cast %144 : vector<1x32x128xf32> to vector<32x128xf32>
    %cst_77 = arith.constant dense<0.000000e+00> : vector<16x128xf32>
    %146 = tpu.matmul %143, %145, %cst_77 {dimension_numbers = #tpu.dot_dimension_numbers<[1], [0], [0], [1], [0, 0, 1, 1], [], []>} : vector<16x32xf32>, vector<32x128xf32>, vector<16x128xf32> -> vector<16x128xf32>
    %c0_78 = arith.constant 0 : index
    %c0_79 = arith.constant 0 : index
    %c0_80 = arith.constant 0 : index
    %147 = vector.load %arg15[%c0_78, %c0_79, %c0_80] : memref<1x1x128xf32, #tpu.memory_space<vmem>>, vector<1x1x128xf32>
    %148 = vector.shape_cast %147 : vector<1x1x128xf32> to vector<1x128xf32>
    %149 = vector.broadcast %148 : vector<1x128xf32> to vector<16x128xf32>
    %150 = arith.addf %146, %149 : vector<16x128xf32>
    %cst_81 = arith.constant 0.000000e+00 : f32
    %151 = vector.broadcast %cst_81 : f32 to vector<16x128xf32>
    %152 = arith.maximumf %150, %151 : vector<16x128xf32>
    %c0_82 = arith.constant 0 : index
    %c0_83 = arith.constant 0 : index
    %c0_84 = arith.constant 0 : index
    %153 = vector.load %arg16[%c0_82, %c0_83, %c0_84] : memref<1x128x32xf32, #tpu.memory_space<vmem>>, vector<1x128x32xf32>
    %154 = vector.shape_cast %153 : vector<1x128x32xf32> to vector<128x32xf32>
    %cst_85 = arith.constant dense<0.000000e+00> : vector<16x32xf32>
    %155 = tpu.matmul %152, %154, %cst_85 {dimension_numbers = #tpu.dot_dimension_numbers<[1], [0], [0], [1], [0, 0, 1, 1], [], []>} : vector<16x128xf32>, vector<128x32xf32>, vector<16x32xf32> -> vector<16x32xf32>
    %c0_86 = arith.constant 0 : index
    %c0_87 = arith.constant 0 : index
    %c0_88 = arith.constant 0 : index
    %156 = vector.load %arg17[%c0_86, %c0_87, %c0_88] : memref<1x1x32xf32, #tpu.memory_space<vmem>>, vector<1x1x32xf32>
    %157 = vector.shape_cast %156 : vector<1x1x32xf32> to vector<1x32xf32>
    %158 = vector.broadcast %157 : vector<1x32xf32> to vector<16x32xf32>
    %159 = arith.addf %155, %158 : vector<16x32xf32>
    %160 = arith.addf %143, %159 : vector<16x32xf32>
    %cst_89 = arith.constant dense<0.000000e+00> : vector<16xf32>
    %161 = vector.multi_reduction <add>, %160, %cst_89 [1] : vector<16x32xf32> to vector<16xf32>
    %162 = vector.shape_cast %161 : vector<16xf32> to vector<16x1xf32>
    %cst_90 = arith.constant 3.200000e+01 : f32
    %163 = vector.broadcast %cst_90 : f32 to vector<16x1xf32>
    %164 = arith.divf %162, %163 : vector<16x1xf32>
    %165 = vector.broadcast %164 : vector<16x1xf32> to vector<16x32xf32>
    %166 = arith.subf %160, %165 : vector<16x32xf32>
    %167 = arith.mulf %166, %166 : vector<16x32xf32>
    %cst_91 = arith.constant dense<0.000000e+00> : vector<16xf32>
    %168 = vector.multi_reduction <add>, %167, %cst_91 [1] : vector<16x32xf32> to vector<16xf32>
    %169 = vector.shape_cast %168 : vector<16xf32> to vector<16x1xf32>
    %cst_92 = arith.constant 3.200000e+01 : f32
    %170 = vector.broadcast %cst_92 : f32 to vector<16x1xf32>
    %171 = arith.divf %169, %170 : vector<16x1xf32>
    %172 = vector.broadcast %164 : vector<16x1xf32> to vector<16x32xf32>
    %173 = arith.subf %160, %172 : vector<16x32xf32>
    %cst_93 = arith.constant 9.99999974E-6 : f32
    %174 = vector.broadcast %cst_93 : f32 to vector<16x1xf32>
    %175 = arith.addf %171, %174 : vector<16x1xf32>
    %176 = math.rsqrt %175 : vector<16x1xf32>
    %177 = vector.broadcast %176 : vector<16x1xf32> to vector<16x32xf32>
    %178 = arith.mulf %173, %177 : vector<16x32xf32>
    %c0_94 = arith.constant 0 : index
    %c0_95 = arith.constant 0 : index
    %c0_96 = arith.constant 0 : index
    %179 = vector.load %arg18[%c0_94, %c0_95, %c0_96] : memref<1x1x32xf32, #tpu.memory_space<vmem>>, vector<1x1x32xf32>
    %180 = vector.shape_cast %179 : vector<1x1x32xf32> to vector<1x32xf32>
    %181 = vector.broadcast %180 : vector<1x32xf32> to vector<16x32xf32>
    %182 = arith.mulf %178, %181 : vector<16x32xf32>
    %c0_97 = arith.constant 0 : index
    %c0_98 = arith.constant 0 : index
    %c0_99 = arith.constant 0 : index
    %183 = vector.load %arg19[%c0_97, %c0_98, %c0_99] : memref<1x1x32xf32, #tpu.memory_space<vmem>>, vector<1x1x32xf32>
    %184 = vector.shape_cast %183 : vector<1x1x32xf32> to vector<1x32xf32>
    %185 = vector.broadcast %184 : vector<1x32xf32> to vector<16x32xf32>
    %186 = arith.addf %182, %185 : vector<16x32xf32>
    %c0_100 = arith.constant 0 : index
    %c0_101 = arith.constant 0 : index
    %187 = vector.load %arg23[%c0_100, %c0_101] : memref<16x32xf32, #tpu.memory_space<vmem>>, vector<16x32xf32>
    tpu.vector_store %arg23[%c0_100, %c0_101], %186 {strides = array<i32>} : memref<16x32xf32, #tpu.memory_space<vmem>>, vector<16x32xf32>,
    %c1_i32 = arith.constant 1 : i32
    %188 = arith.cmpi eq, %arg0, %c1_i32 : i32
    %189 = arith.extui %188 : i1 to i32
    %c0_i32_102 = arith.constant 0 : i32
    %190 = arith.cmpi ne, %189, %c0_i32_102 : i32
    scf.if %190 {
      %c0_103 = arith.constant 0 : index
      %c0_104 = arith.constant 0 : index
      %191 = vector.load %arg20[%c0_103, %c0_104] : memref<32x128xf32, #tpu.memory_space<vmem>>, vector<32x128xf32>
      %cst_105 = arith.constant dense<0.000000e+00> : vector<16x128xf32>
      %192 = tpu.matmul %186, %191, %cst_105 {dimension_numbers = #tpu.dot_dimension_numbers<[1], [0], [0], [1], [0, 0, 1, 1], [], []>} : vector<16x32xf32>, vector<32x128xf32>, vector<16x128xf32> -> vector<16x128xf32>
      %c0_106 = arith.constant 0 : index
      %c0_107 = arith.constant 0 : index
      %193 = vector.load %arg21[%c0_106, %c0_107] : memref<1x128xf32, #tpu.memory_space<vmem>>, vector<1x128xf32>
      %194 = vector.broadcast %193 : vector<1x128xf32> to vector<16x128xf32>
      %195 = arith.addf %192, %194 : vector<16x128xf32>
      %c0_108 = arith.constant 0 : index
      %c0_109 = arith.constant 0 : index
      %196 = vector.load %arg22[%c0_108, %c0_109] : memref<16x128xf32, #tpu.memory_space<vmem>>, vector<16x128xf32>
      tpu.vector_store %arg22[%c0_108, %c0_109], %195 {strides = array<i32>} : memref<16x128xf32, #tpu.memory_space<vmem>>, vector<16x128xf32>,
    } else {
    }
    return
  }
  func.func @transform_0(%arg0: i32) -> (i32, i32) {
    %c0_i32 = arith.constant 0 : i32
    %c0_i32_0 = arith.constant 0 : i32
    %c0_i32_1 = arith.constant 0 : i32
    return %c0_i32, %c0_i32_0 : i32, i32
  }
  func.func @transform_1(%arg0: i32) -> (i32, i32) {
    %c0_i32 = arith.constant 0 : i32
    %c0_i32_0 = arith.constant 0 : i32
    %c0_i32_1 = arith.constant 0 : i32
    return %c0_i32, %c0_i32_0 : i32, i32
  }
  func.func @transform_2(%arg0: i32) -> (i32, i32) {
    %c0_i32 = arith.constant 0 : i32
    %c0_i32_0 = arith.constant 0 : i32
    %c0_i32_1 = arith.constant 0 : i32
    return %c0_i32, %c0_i32_0 : i32, i32
  }
  func.func @transform_3(%arg0: i32) -> (i32, i32) {
    %c0_i32 = arith.constant 0 : i32
    %c0_i32_0 = arith.constant 0 : i32
    %c0_i32_1 = arith.constant 0 : i32
    return %c0_i32, %c0_i32_0 : i32, i32
  }
  func.func @transform_4(%arg0: i32) -> (i32, i32, i32) {
    %c0_i32 = arith.constant 0 : i32
    %c0_i32_0 = arith.constant 0 : i32
    %c0_i32_1 = arith.constant 0 : i32
    %c0_i32_2 = arith.constant 0 : i32
    return %c0_i32, %c0_i32_0, %c0_i32_1 : i32, i32, i32
  }
  func.func @transform_5(%arg0: i32) -> (i32, i32) {
    %c0_i32 = arith.constant 0 : i32
    %c0_i32_0 = arith.constant 0 : i32
    %c0_i32_1 = arith.constant 0 : i32
    return %c0_i32, %c0_i32_0 : i32, i32
  }
  func.func @transform_6(%arg0: i32) -> (i32, i32) {
    %c0_i32 = arith.constant 0 : i32
    %c0_i32_0 = arith.constant 0 : i32
    %c0_i32_1 = arith.constant 0 : i32
    return %c0_i32, %c0_i32_0 : i32, i32
  }
  func.func @transform_7(%arg0: i32) -> (i32, i32, i32) {
    %c0_i32 = arith.constant 0 : i32
    %c0_i32_0 = arith.constant 0 : i32
    %c0_i32_1 = arith.constant 0 : i32
    return %arg0, %c0_i32, %c0_i32_0 : i32, i32, i32
  }
  func.func @transform_8(%arg0: i32) -> (i32, i32, i32) {
    %c0_i32 = arith.constant 0 : i32
    %c0_i32_0 = arith.constant 0 : i32
    %c0_i32_1 = arith.constant 0 : i32
    return %arg0, %c0_i32, %c0_i32_0 : i32, i32, i32
  }
  func.func @transform_9(%arg0: i32) -> (i32, i32, i32) {
    %c0_i32 = arith.constant 0 : i32
    %c0_i32_0 = arith.constant 0 : i32
    %c0_i32_1 = arith.constant 0 : i32
    return %arg0, %c0_i32, %c0_i32_0 : i32, i32, i32
  }
  func.func @transform_10(%arg0: i32) -> (i32, i32, i32) {
    %c0_i32 = arith.constant 0 : i32
    %c0_i32_0 = arith.constant 0 : i32
    %c0_i32_1 = arith.constant 0 : i32
    return %arg0, %c0_i32, %c0_i32_0 : i32, i32, i32
  }
  func.func @transform_11(%arg0: i32) -> (i32, i32, i32) {
    %c0_i32 = arith.constant 0 : i32
    %c0_i32_0 = arith.constant 0 : i32
    %c0_i32_1 = arith.constant 0 : i32
    return %arg0, %c0_i32, %c0_i32_0 : i32, i32, i32
  }
  func.func @transform_12(%arg0: i32) -> (i32, i32, i32) {
    %c0_i32 = arith.constant 0 : i32
    %c0_i32_0 = arith.constant 0 : i32
    %c0_i32_1 = arith.constant 0 : i32
    return %arg0, %c0_i32, %c0_i32_0 : i32, i32, i32
  }
  func.func @transform_13(%arg0: i32) -> (i32, i32, i32) {
    %c0_i32 = arith.constant 0 : i32
    %c0_i32_0 = arith.constant 0 : i32
    %c0_i32_1 = arith.constant 0 : i32
    return %arg0, %c0_i32, %c0_i32_0 : i32, i32, i32
  }
  func.func @transform_14(%arg0: i32) -> (i32, i32, i32) {
    %c0_i32 = arith.constant 0 : i32
    %c0_i32_0 = arith.constant 0 : i32
    %c0_i32_1 = arith.constant 0 : i32
    return %arg0, %c0_i32, %c0_i32_0 : i32, i32, i32
  }
  func.func @transform_15(%arg0: i32) -> (i32, i32, i32) {
    %c0_i32 = arith.constant 0 : i32
    %c0_i32_0 = arith.constant 0 : i32
    %c0_i32_1 = arith.constant 0 : i32
    return %arg0, %c0_i32, %c0_i32_0 : i32, i32, i32
  }
  func.func @transform_16(%arg0: i32) -> (i32, i32, i32) {
    %c0_i32 = arith.constant 0 : i32
    %c0_i32_0 = arith.constant 0 : i32
    %c0_i32_1 = arith.constant 0 : i32
    return %arg0, %c0_i32, %c0_i32_0 : i32, i32, i32
  }
  func.func @transform_17(%arg0: i32) -> (i32, i32, i32) {
    %c0_i32 = arith.constant 0 : i32
    %c0_i32_0 = arith.constant 0 : i32
    %c0_i32_1 = arith.constant 0 : i32
    return %arg0, %c0_i32, %c0_i32_0 : i32, i32, i32
  }
  func.func @transform_18(%arg0: i32) -> (i32, i32, i32) {
    %c0_i32 = arith.constant 0 : i32
    %c0_i32_0 = arith.constant 0 : i32
    %c0_i32_1 = arith.constant 0 : i32
    return %arg0, %c0_i32, %c0_i32_0 : i32, i32, i32
  }
  func.func @transform_19(%arg0: i32) -> (i32, i32) {
    %c0_i32 = arith.constant 0 : i32
    %c0_i32_0 = arith.constant 0 : i32
    %c0_i32_1 = arith.constant 0 : i32
    return %c0_i32, %c0_i32_0 : i32, i32
  }
  func.func @transform_20(%arg0: i32) -> (i32, i32) {
    %c0_i32 = arith.constant 0 : i32
    %c0_i32_0 = arith.constant 0 : i32
    %c0_i32_1 = arith.constant 0 : i32
    return %c0_i32, %c0_i32_0 : i32, i32
  }
  func.func @transform_21(%arg0: i32) -> (i32, i32) {
    %c0_i32 = arith.constant 0 : i32
    %c0_i32_0 = arith.constant 0 : i32
    %c0_i32_1 = arith.constant 0 : i32
    return %c0_i32, %c0_i32_0 : i32, i32
  }
}

</mosaic_0001>

<llo_original>
// kernel: tpu_custom_call.1
$region0: #{tpu_custom_call.1}
  #allocation0 [shape = 'u32[]', space=smem, size = 0x4, offset = 0x4, fixed_abs, tag = 'smem constant byte address 0x4 - core index']
  #allocation1 [shape = 'u32[72,128]{1,0:T(1,128)}', space=vmem, size = 0x9000, scoped, tag = 'internal scratch']
  #allocation2 [shape = 'f32[16,32]{1,0:T(8,128)}', space=vmem, size = 0x2000, scoped, tag = 'scratch operand']
  #allocation3 [shape = 'f32[16,96]{1,0:T(8,128)}', space=vmem, size = 0x2000, scoped, tag = 'scratch operand']
  #allocation4 [shape = 'f32[16,32]{1,0:T(8,128)}', space=vmem, size = 0x2000, scoped, tag = 'scratch operand']
  %s0 = inlined_call_operand.vmem [shape: f32[16,8], index: 0, kind: input, shape index: {}]
  %s1 = inlined_call_operand.vmem [shape: f32[16,8], index: 1, kind: input, shape index: {}]
  %s2 = inlined_call_operand.vmem [shape: f32[1,8], index: 2, kind: input, shape index: {}]
  %s3 = inlined_call_operand.vmem [shape: f32[16,32], index: 3, kind: input, shape index: {}]
  %s4 = inlined_call_operand.vmem [shape: f32[2,1,8], index: 4, kind: input, shape index: {}]
  %s5 = inlined_call_operand.vmem [shape: f32[8,32], index: 5, kind: input, shape index: {}]
  %s6 = inlined_call_operand.vmem [shape: f32[1,32], index: 6, kind: input, shape index: {}]
  %s7 = inlined_call_operand.vmem [shape: f32[2,32,96], index: 7, kind: input, shape index: {}]
  %s8 = inlined_call_operand.vmem [shape: f32[2,1,96], index: 8, kind: input, shape index: {}]
  %s9 = inlined_call_operand.vmem [shape: f32[2,32,32], index: 9, kind: input, shape index: {}]
  %s10 = inlined_call_operand.vmem [shape: f32[2,1,32], index: 10, kind: input, shape index: {}]
  %s11 = inlined_call_operand.vmem [shape: f32[2,1,32], index: 11, kind: input, shape index: {}]
  %s12 = inlined_call_operand.vmem [shape: f32[2,1,32], index: 12, kind: input, shape index: {}]
  %s13 = inlined_call_operand.vmem [shape: f32[2,32,128], index: 13, kind: input, shape index: {}]
  %s14 = inlined_call_operand.vmem [shape: f32[2,1,128], index: 14, kind: input, shape index: {}]
  %s15 = inlined_call_operand.vmem [shape: f32[2,128,32], index: 15, kind: input, shape index: {}]
  %s16 = inlined_call_operand.vmem [shape: f32[2,1,32], index: 16, kind: input, shape index: {}]
  %s17 = inlined_call_operand.vmem [shape: f32[2,1,32], index: 17, kind: input, shape index: {}]
  %s18 = inlined_call_operand.vmem [shape: f32[2,1,32], index: 18, kind: input, shape index: {}]
  %s19 = inlined_call_operand.vmem [shape: f32[32,128], index: 19, kind: input, shape index: {}]
  %s20 = inlined_call_operand.vmem [shape: f32[1,128], index: 20, kind: input, shape index: {}]
  %s21 = inlined_call_operand.hbm [shape: f32[16,128], index: 21, kind: output, shape index: {}]
  %s22 = sld [smem:[#allocation0]]
  $region125: #{tpu_custom_call.1} parent=0
    _
  %s24 = ssub.s32 1, %s22
  %s25 = scalar_select 0, %s24, %s22
  $region1: #{tpu_custom_call.1} parent=0
    #allocation5 [shape = 'u8[8192]{0}', space=vmem, size = 0x2000, scoped, tag = 'output window, operand 0, single buffered']
    #allocation6 [shape = 's32[2]{0}', space=sflag, size = 0x8, scoped, tag = 'scoped memory for tpu_custom_call.1']
    %26 = vsyncpa [#allocation6], 0
    loop: start=0, step=1, limit=4
    $region2: #{tpu_custom_call.1} parent=1 // loop_pre_header
      _
    $region3: #{tpu_custom_call.1} parent=1 // loop_header
      %s28 = sphi 0, %s32
      %p29 = scmp.ge.s32.totalorder %s28, 4
      %s36 = sphi 0, %s36
      %s38 = sphi 0, %s36
      %s39 = sphi 0, %s38
      %s53 = sphi 0, %s39
      %s57 = sphi 0, %s57
      %s59 = sphi 0, %s57
      %s60 = sphi 0, %s59
      %s74 = sphi 0, %s60
      %s78 = sphi 0, %s78
      %s80 = sphi 0, %s78
      %s81 = sphi 0, %s80
      %s95 = sphi 0, %s81
      %s99 = sphi 0, %s99
      %s101 = sphi 0, %s99
      %s102 = sphi 0, %s101
      %s116 = sphi 0, %s102
      %s120 = sphi 0, %s120
      %s122 = sphi 0, %s120
      %s123 = sphi 0, %s122
      %s137 = sphi 0, %s123
      %s141 = sphi 0, %s141
      %s143 = sphi 0, %s141
      %s144 = sphi 0, %s143
      %s158 = sphi 0, %s144
      %s162 = sphi 0, %s162
      %s164 = sphi 0, %s162
      %s165 = sphi 0, %s164
      %s179 = sphi 0, %s165
      %s185 = sphi 0, %s187
      %s188 = sphi 0, %s185
      %s189 = sphi 0, %s188
      %s205 = sphi 0, %s189
      %s211 = sphi 0, %s213
      %s214 = sphi 0, %s211
      %s215 = sphi 0, %s214
      %s231 = sphi 0, %s215
      %s237 = sphi 0, %s239
      %s240 = sphi 0, %s237
      %s241 = sphi 0, %s240
      %s257 = sphi 0, %s241
      %s263 = sphi 0, %s265
      %s266 = sphi 0, %s263
      %s267 = sphi 0, %s266
      %s283 = sphi 0, %s267
      %s289 = sphi 0, %s291
      %s292 = sphi 0, %s289
      %s293 = sphi 0, %s292
      %s309 = sphi 0, %s293
      %s315 = sphi 0, %s317
      %s318 = sphi 0, %s315
      %s319 = sphi 0, %s318
      %s335 = sphi 0, %s319
      %s341 = sphi 0, %s343
      %s344 = sphi 0, %s341
      %s345 = sphi 0, %s344
      %s361 = sphi 0, %s345
      %s367 = sphi 0, %s369
      %s370 = sphi 0, %s367
      %s371 = sphi 0, %s370
      %s387 = sphi 0, %s371
      %s393 = sphi 0, %s395
      %s396 = sphi 0, %s393
      %s397 = sphi 0, %s396
      %s413 = sphi 0, %s397
      %s419 = sphi 0, %s421
      %s422 = sphi 0, %s419
      %s423 = sphi 0, %s422
      %s439 = sphi 0, %s423
      %s445 = sphi 0, %s447
      %s448 = sphi 0, %s445
      %s449 = sphi 0, %s448
      %s465 = sphi 0, %s449
      %s471 = sphi 0, %s473
      %s474 = sphi 0, %s471
      %s475 = sphi 0, %s474
      %s491 = sphi 0, %s475
      %s495 = sphi 0, %s495
      %s497 = sphi 0, %s495
      %s498 = sphi 0, %s497
      %s512 = sphi 0, %s498
      %s516 = sphi 0, %s516
      %s518 = sphi 0, %s516
      %s519 = sphi 0, %s518
      %s533 = sphi 0, %s519
      %s537 = sphi 0, %s537
      %s539 = sphi 0, %s537
      %s540 = sphi 0, %s539
      %s554 = sphi 0, %s540
    $region4: #{tpu_custom_call.1} parent=1 // loop_header_branch
      %31 = sbr.rel (%p29) target = $region8
    $region5: #{tpu_custom_call.1} parent=1 // loop_body
      %s33 = ssub.s32 %s28, 1
      %s34 = ssub.s32 %s28, 2
      %s35 = sadd.s32 %s28, 1
      %s37 = sadd.s32 %s36, 1
      %p40 = scmp.eq.s32.totalorder %s28, 1
      %p41 = scmp.ne.s32.totalorder %s36, %s38
      %p42 = scmp.eq.s32.totalorder %s28, 0
      %p43 = por %p41, %p42
      %p44 = scmp.ne.s32.totalorder %s36, %s38
      %p45 = scmp.eq.s32.totalorder %s33, 1
      %p46 = por %p44, %p45
      %p47 = scmp.ne.s32.totalorder %s38, %s39
      %p48 = scmp.eq.s32.totalorder %s33, 0
      %p49 = por %p47, %p48
      %p50 = scmp.ne.s32.totalorder %s38, %s39
      %p51 = scmp.eq.s32.totalorder %s34, 1
      %p52 = por %p50, %p51
      %p54 = scmp.ne.s32.totalorder %s39, %s53
      %p55 = scmp.eq.s32.totalorder %s34, 0
      %p56 = por %p54, %p55
      %s58 = sadd.s32 %s57, 1
      %p61 = scmp.eq.s32.totalorder %s28, 1
      %p62 = scmp.ne.s32.totalorder %s57, %s59
      %p63 = scmp.eq.s32.totalorder %s28, 0
      %p64 = por %p62, %p63
      %p65 = scmp.ne.s32.totalorder %s57, %s59
      %p66 = scmp.eq.s32.totalorder %s33, 1
      %p67 = por %p65, %p66
      %p68 = scmp.ne.s32.totalorder %s59, %s60
      %p69 = scmp.eq.s32.totalorder %s33, 0
      %p70 = por %p68, %p69
      %p71 = scmp.ne.s32.totalorder %s59, %s60
      %p72 = scmp.eq.s32.totalorder %s34, 1
      %p73 = por %p71, %p72
      %p75 = scmp.ne.s32.totalorder %s60, %s74
      %p76 = scmp.eq.s32.totalorder %s34, 0
      %p77 = por %p75, %p76
      %s79 = sadd.s32 %s78, 1
      %p82 = scmp.eq.s32.totalorder %s28, 1
      %p83 = scmp.ne.s32.totalorder %s78, %s80
      %p84 = scmp.eq.s32.totalorder %s28, 0
      %p85 = por %p83, %p84
      %p86 = scmp.ne.s32.totalorder %s78, %s80
      %p87 = scmp.eq.s32.totalorder %s33, 1
      %p88 = por %p86, %p87
      %p89 = scmp.ne.s32.totalorder %s80, %s81
      %p90 = scmp.eq.s32.totalorder %s33, 0
      %p91 = por %p89, %p90
      %p92 = scmp.ne.s32.totalorder %s80, %s81
      %p93 = scmp.eq.s32.totalorder %s34, 1
      %p94 = por %p92, %p93
      %p96 = scmp.ne.s32.totalorder %s81, %s95
      %p97 = scmp.eq.s32.totalorder %s34, 0
      %p98 = por %p96, %p97
      %s100 = sadd.s32 %s99, 1
      %p103 = scmp.eq.s32.totalorder %s28, 1
      %p104 = scmp.ne.s32.totalorder %s99, %s101
      %p105 = scmp.eq.s32.totalorder %s28, 0
      %p106 = por %p104, %p105
      %p107 = scmp.ne.s32.totalorder %s99, %s101
      %p108 = scmp.eq.s32.totalorder %s33, 1
      %p109 = por %p107, %p108
      %p110 = scmp.ne.s32.totalorder %s101, %s102
      %p111 = scmp.eq.s32.totalorder %s33, 0
      %p112 = por %p110, %p111
      %p113 = scmp.ne.s32.totalorder %s101, %s102
      %p114 = scmp.eq.s32.totalorder %s34, 1
      %p115 = por %p113, %p114
      %p117 = scmp.ne.s32.totalorder %s102, %s116
      %p118 = scmp.eq.s32.totalorder %s34, 0
      %p119 = por %p117, %p118
      %s121 = sadd.s32 %s120, 1
      %p124 = scmp.eq.s32.totalorder %s28, 1
      %p125 = scmp.ne.s32.totalorder %s120, %s122
      %p126 = scmp.eq.s32.totalorder %s28, 0
      %p127 = por %p125, %p126
      %p128 = scmp.ne.s32.totalorder %s120, %s122
      %p129 = scmp.eq.s32.totalorder %s33, 1
      %p130 = por %p128, %p129
      %p131 = scmp.ne.s32.totalorder %s122, %s123
      %p132 = scmp.eq.s32.totalorder %s33, 0
      %p133 = por %p131, %p132
      %p134 = scmp.ne.s32.totalorder %s122, %s123
      %p135 = scmp.eq.s32.totalorder %s34, 1
      %p136 = por %p134, %p135
      %p138 = scmp.ne.s32.totalorder %s123, %s137
      %p139 = scmp.eq.s32.totalorder %s34, 0
      %p140 = por %p138, %p139
      %s142 = sadd.s32 %s141, 1
      %p145 = scmp.eq.s32.totalorder %s28, 1
      %p146 = scmp.ne.s32.totalorder %s141, %s143
      %p147 = scmp.eq.s32.totalorder %s28, 0
      %p148 = por %p146, %p147
      %p149 = scmp.ne.s32.totalorder %s141, %s143
      %p150 = scmp.eq.s32.totalorder %s33, 1
      %p151 = por %p149, %p150
      %p152 = scmp.ne.s32.totalorder %s143, %s144
      %p153 = scmp.eq.s32.totalorder %s33, 0
      %p154 = por %p152, %p153
      %p155 = scmp.ne.s32.totalorder %s143, %s144
      %p156 = scmp.eq.s32.totalorder %s34, 1
      %p157 = por %p155, %p156
      %p159 = scmp.ne.s32.totalorder %s144, %s158
      %p160 = scmp.eq.s32.totalorder %s34, 0
      %p161 = por %p159, %p160
      %s163 = sadd.s32 %s162, 1
      %p166 = scmp.eq.s32.totalorder %s28, 1
      %p167 = scmp.ne.s32.totalorder %s162, %s164
      %p168 = scmp.eq.s32.totalorder %s28, 0
      %p169 = por %p167, %p168
      %p170 = scmp.ne.s32.totalorder %s162, %s164
      %p171 = scmp.eq.s32.totalorder %s33, 1
      %p172 = por %p170, %p171
      %p173 = scmp.ne.s32.totalorder %s164, %s165
      %p174 = scmp.eq.s32.totalorder %s33, 0
      %p175 = por %p173, %p174
      %p176 = scmp.ne.s32.totalorder %s164, %s165
      %p177 = scmp.eq.s32.totalorder %s34, 1
      %p178 = por %p176, %p177
      %p180 = scmp.ne.s32.totalorder %s165, %s179
      %p181 = scmp.eq.s32.totalorder %s34, 0
      %p182 = por %p180, %p181
      %s183 = ssub.s32 %s28, %s35
      %p184 = scmp.eq.s32.totalorder %s183, 0
      %s186 = sadd.s32 %s185, 1
      %s187 = scalar_select %p184, %s185, %s186
      %p190 = pneg %p184
      %p191 = scmp.eq.s32.totalorder %s28, 1
      %p192 = por %p190, %p191
      %p193 = scmp.ne.s32.totalorder %s185, %s188
      %p194 = scmp.eq.s32.totalorder %s28, 0
      %p195 = por %p193, %p194
      %p196 = scmp.ne.s32.totalorder %s185, %s188
      %p197 = scmp.eq.s32.totalorder %s33, 1
      %p198 = por %p196, %p197
      %p199 = scmp.ne.s32.totalorder %s188, %s189
      %p200 = scmp.eq.s32.totalorder %s33, 0
      %p201 = por %p199, %p200
      %p202 = scmp.ne.s32.totalorder %s188, %s189
      %p203 = scmp.eq.s32.totalorder %s34, 1
      %p204 = por %p202, %p203
      %p206 = scmp.ne.s32.totalorder %s189, %s205
      %p207 = scmp.eq.s32.totalorder %s34, 0
      %p208 = por %p206, %p207
      %s209 = ssub.s32 %s28, %s35
      %p210 = scmp.eq.s32.totalorder %s209, 0
      %s212 = sadd.s32 %s211, 1
      %s213 = scalar_select %p210, %s211, %s212
      %p216 = pneg %p210
      %p217 = scmp.eq.s32.totalorder %s28, 1
      %p218 = por %p216, %p217
      %p219 = scmp.ne.s32.totalorder %s211, %s214
      %p220 = scmp.eq.s32.totalorder %s28, 0
      %p221 = por %p219, %p220
      %p222 = scmp.ne.s32.totalorder %s211, %s214
      %p223 = scmp.eq.s32.totalorder %s33, 1
      %p224 = por %p222, %p223
      %p225 = scmp.ne.s32.totalorder %s214, %s215
      %p226 = scmp.eq.s32.totalorder %s33, 0
      %p227 = por %p225, %p226
      %p228 = scmp.ne.s32.totalorder %s214, %s215
      %p229 = scmp.eq.s32.totalorder %s34, 1
      %p230 = por %p228, %p229
      %p232 = scmp.ne.s32.totalorder %s215, %s231
      %p233 = scmp.eq.s32.totalorder %s34, 0
      %p234 = por %p232, %p233
      %s235 = ssub.s32 %s28, %s35
      %p236 = scmp.eq.s32.totalorder %s235, 0
      %s238 = sadd.s32 %s237, 1
      %s239 = scalar_select %p236, %s237, %s238
      %p242 = pneg %p236
      %p243 = scmp.eq.s32.totalorder %s28, 1
      %p244 = por %p242, %p243
      %p245 = scmp.ne.s32.totalorder %s237, %s240
      %p246 = scmp.eq.s32.totalorder %s28, 0
      %p247 = por %p245, %p246
      %p248 = scmp.ne.s32.totalorder %s237, %s240
      %p249 = scmp.eq.s32.totalorder %s33, 1
      %p250 = por %p248, %p249
      %p251 = scmp.ne.s32.totalorder %s240, %s241
      %p252 = scmp.eq.s32.totalorder %s33, 0
      %p253 = por %p251, %p252
      %p254 = scmp.ne.s32.totalorder %s240, %s241
      %p255 = scmp.eq.s32.totalorder %s34, 1
      %p256 = por %p254, %p255
      %p258 = scmp.ne.s32.totalorder %s241, %s257
      %p259 = scmp.eq.s32.totalorder %s34, 0
      %p260 = por %p258, %p259
      %s261 = ssub.s32 %s28, %s35
      %p262 = scmp.eq.s32.totalorder %s261, 0
      %s264 = sadd.s32 %s263, 1
      %s265 = scalar_select %p262, %s263, %s264
      %p268 = pneg %p262
      %p269 = scmp.eq.s32.totalorder %s28, 1
      %p270 = por %p268, %p269
      %p271 = scmp.ne.s32.totalorder %s263, %s266
      %p272 = scmp.eq.s32.totalorder %s28, 0
      %p273 = por %p271, %p272
      %p274 = scmp.ne.s32.totalorder %s263, %s266
      %p275 = scmp.eq.s32.totalorder %s33, 1
      %p276 = por %p274, %p275
      %p277 = scmp.ne.s32.totalorder %s266, %s267
      %p278 = scmp.eq.s32.totalorder %s33, 0
      %p279 = por %p277, %p278
      %p280 = scmp.ne.s32.totalorder %s266, %s267
      %p281 = scmp.eq.s32.totalorder %s34, 1
      %p282 = por %p280, %p281
      %p284 = scmp.ne.s32.totalorder %s267, %s283
      %p285 = scmp.eq.s32.totalorder %s34, 0
      %p286 = por %p284, %p285
      %s287 = ssub.s32 %s28, %s35
      %p288 = scmp.eq.s32.totalorder %s287, 0
      %s290 = sadd.s32 %s289, 1
      %s291 = scalar_select %p288, %s289, %s290
      %p294 = pneg %p288
      %p295 = scmp.eq.s32.totalorder %s28, 1
      %p296 = por %p294, %p295
      %p297 = scmp.ne.s32.totalorder %s289, %s292
      %p298 = scmp.eq.s32.totalorder %s28, 0
      %p299 = por %p297, %p298
      %p300 = scmp.ne.s32.totalorder %s289, %s292
      %p301 = scmp.eq.s32.totalorder %s33, 1
      %p302 = por %p300, %p301
      %p303 = scmp.ne.s32.totalorder %s292, %s293
      %p304 = scmp.eq.s32.totalorder %s33, 0
      %p305 = por %p303, %p304
      %p306 = scmp.ne.s32.totalorder %s292, %s293
      %p307 = scmp.eq.s32.totalorder %s34, 1
      %p308 = por %p306, %p307
      %p310 = scmp.ne.s32.totalorder %s293, %s309
      %p311 = scmp.eq.s32.totalorder %s34, 0
      %p312 = por %p310, %p311
      %s313 = ssub.s32 %s28, %s35
      %p314 = scmp.eq.s32.totalorder %s313, 0
      %s316 = sadd.s32 %s315, 1
      %s317 = scalar_select %p314, %s315, %s316
      %p320 = pneg %p314
      %p321 = scmp.eq.s32.totalorder %s28, 1
      %p322 = por %p320, %p321
      %p323 = scmp.ne.s32.totalorder %s315, %s318
      %p324 = scmp.eq.s32.totalorder %s28, 0
      %p325 = por %p323, %p324
      %p326 = scmp.ne.s32.totalorder %s315, %s318
      %p327 = scmp.eq.s32.totalorder %s33, 1
      %p328 = por %p326, %p327
      %p329 = scmp.ne.s32.totalorder %s318, %s319
      %p330 = scmp.eq.s32.totalorder %s33, 0
      %p331 = por %p329, %p330
      %p332 = scmp.ne.s32.totalorder %s318, %s319
      %p333 = scmp.eq.s32.totalorder %s34, 1
      %p334 = por %p332, %p333
      %p336 = scmp.ne.s32.totalorder %s319, %s335
      %p337 = scmp.eq.s32.totalorder %s34, 0
      %p338 = por %p336, %p337
      %s339 = ssub.s32 %s28, %s35
      %p340 = scmp.eq.s32.totalorder %s339, 0
      %s342 = sadd.s32 %s341, 1
      %s343 = scalar_select %p340, %s341, %s342
      %p346 = pneg %p340
      %p347 = scmp.eq.s32.totalorder %s28, 1
      %p348 = por %p346, %p347
      %p349 = scmp.ne.s32.totalorder %s341, %s344
      %p350 = scmp.eq.s32.totalorder %s28, 0
      %p351 = por %p349, %p350
      %p352 = scmp.ne.s32.totalorder %s341, %s344
      %p353 = scmp.eq.s32.totalorder %s33, 1
      %p354 = por %p352, %p353
      %p355 = scmp.ne.s32.totalorder %s344, %s345
      %p356 = scmp.eq.s32.totalorder %s33, 0
      %p357 = por %p355, %p356
      %p358 = scmp.ne.s32.totalorder %s344, %s345
      %p359 = scmp.eq.s32.totalorder %s34, 1
      %p360 = por %p358, %p359
      %p362 = scmp.ne.s32.totalorder %s345, %s361
      %p363 = scmp.eq.s32.totalorder %s34, 0
      %p364 = por %p362, %p363
      %s365 = ssub.s32 %s28, %s35
      %p366 = scmp.eq.s32.totalorder %s365, 0
      %s368 = sadd.s32 %s367, 1
      %s369 = scalar_select %p366, %s367, %s368
      %p372 = pneg %p366
      %p373 = scmp.eq.s32.totalorder %s28, 1
      %p374 = por %p372, %p373
      %p375 = scmp.ne.s32.totalorder %s367, %s370
      %p376 = scmp.eq.s32.totalorder %s28, 0
      %p377 = por %p375, %p376
      %p378 = scmp.ne.s32.totalorder %s367, %s370
      %p379 = scmp.eq.s32.totalorder %s33, 1
      %p380 = por %p378, %p379
      %p381 = scmp.ne.s32.totalorder %s370, %s371
      %p382 = scmp.eq.s32.totalorder %s33, 0
      %p383 = por %p381, %p382
      %p384 = scmp.ne.s32.totalorder %s370, %s371
      %p385 = scmp.eq.s32.totalorder %s34, 1
      %p386 = por %p384, %p385
      %p388 = scmp.ne.s32.totalorder %s371, %s387
      %p389 = scmp.eq.s32.totalorder %s34, 0
      %p390 = por %p388, %p389
      %s391 = ssub.s32 %s28, %s35
      %p392 = scmp.eq.s32.totalorder %s391, 0
      %s394 = sadd.s32 %s393, 1
      %s395 = scalar_select %p392, %s393, %s394
      %p398 = pneg %p392
      %p399 = scmp.eq.s32.totalorder %s28, 1
      %p400 = por %p398, %p399
      %p401 = scmp.ne.s32.totalorder %s393, %s396
      %p402 = scmp.eq.s32.totalorder %s28, 0
      %p403 = por %p401, %p402
      %p404 = scmp.ne.s32.totalorder %s393, %s396
      %p405 = scmp.eq.s32.totalorder %s33, 1
      %p406 = por %p404, %p405
      %p407 = scmp.ne.s32.totalorder %s396, %s397
      %p408 = scmp.eq.s32.totalorder %s33, 0
      %p409 = por %p407, %p408
      %p410 = scmp.ne.s32.totalorder %s396, %s397
      %p411 = scmp.eq.s32.totalorder %s34, 1
      %p412 = por %p410, %p411
      %p414 = scmp.ne.s32.totalorder %s397, %s413
      %p415 = scmp.eq.s32.totalorder %s34, 0
      %p416 = por %p414, %p415
      %s417 = ssub.s32 %s28, %s35
      %p418 = scmp.eq.s32.totalorder %s417, 0
      %s420 = sadd.s32 %s419, 1
      %s421 = scalar_select %p418, %s419, %s420
      %p424 = pneg %p418
      %p425 = scmp.eq.s32.totalorder %s28, 1
      %p426 = por %p424, %p425
      %p427 = scmp.ne.s32.totalorder %s419, %s422
      %p428 = scmp.eq.s32.totalorder %s28, 0
      %p429 = por %p427, %p428
      %p430 = scmp.ne.s32.totalorder %s419, %s422
      %p431 = scmp.eq.s32.totalorder %s33, 1
      %p432 = por %p430, %p431
      %p433 = scmp.ne.s32.totalorder %s422, %s423
      %p434 = scmp.eq.s32.totalorder %s33, 0
      %p435 = por %p433, %p434
      %p436 = scmp.ne.s32.totalorder %s422, %s423
      %p437 = scmp.eq.s32.totalorder %s34, 1
      %p438 = por %p436, %p437
      %p440 = scmp.ne.s32.totalorder %s423, %s439
      %p441 = scmp.eq.s32.totalorder %s34, 0
      %p442 = por %p440, %p441
      %s443 = ssub.s32 %s28, %s35
      %p444 = scmp.eq.s32.totalorder %s443, 0
      %s446 = sadd.s32 %s445, 1
      %s447 = scalar_select %p444, %s445, %s446
      %p450 = pneg %p444
      %p451 = scmp.eq.s32.totalorder %s28, 1
      %p452 = por %p450, %p451
      %p453 = scmp.ne.s32.totalorder %s445, %s448
      %p454 = scmp.eq.s32.totalorder %s28, 0
      %p455 = por %p453, %p454
      %p456 = scmp.ne.s32.totalorder %s445, %s448
      %p457 = scmp.eq.s32.totalorder %s33, 1
      %p458 = por %p456, %p457
      %p459 = scmp.ne.s32.totalorder %s448, %s449
      %p460 = scmp.eq.s32.totalorder %s33, 0
      %p461 = por %p459, %p460
      %p462 = scmp.ne.s32.totalorder %s448, %s449
      %p463 = scmp.eq.s32.totalorder %s34, 1
      %p464 = por %p462, %p463
      %p466 = scmp.ne.s32.totalorder %s449, %s465
      %p467 = scmp.eq.s32.totalorder %s34, 0
      %p468 = por %p466, %p467
      %s469 = ssub.s32 %s28, %s35
      %p470 = scmp.eq.s32.totalorder %s469, 0
      %s472 = sadd.s32 %s471, 1
      %s473 = scalar_select %p470, %s471, %s472
      %p476 = pneg %p470
      %p477 = scmp.eq.s32.totalorder %s28, 1
      %p478 = por %p476, %p477
      %p479 = scmp.ne.s32.totalorder %s471, %s474
      %p480 = scmp.eq.s32.totalorder %s28, 0
      %p481 = por %p479, %p480
      %p482 = scmp.ne.s32.totalorder %s471, %s474
      %p483 = scmp.eq.s32.totalorder %s33, 1
      %p484 = por %p482, %p483
      %p485 = scmp.ne.s32.totalorder %s474, %s475
      %p486 = scmp.eq.s32.totalorder %s33, 0
      %p487 = por %p485, %p486
      %p488 = scmp.ne.s32.totalorder %s474, %s475
      %p489 = scmp.eq.s32.totalorder %s34, 1
      %p490 = por %p488, %p489
      %p492 = scmp.ne.s32.totalorder %s475, %s491
      %p493 = scmp.eq.s32.totalorder %s34, 0
      %p494 = por %p492, %p493
      %s496 = sadd.s32 %s495, 1
      %p499 = scmp.eq.s32.totalorder %s28, 1
      %p500 = scmp.ne.s32.totalorder %s495, %s497
      %p501 = scmp.eq.s32.totalorder %s28, 0
      %p502 = por %p500, %p501
      %p503 = scmp.ne.s32.totalorder %s495, %s497
      %p504 = scmp.eq.s32.totalorder %s33, 1
      %p505 = por %p503, %p504
      %p506 = scmp.ne.s32.totalorder %s497, %s498
      %p507 = scmp.eq.s32.totalorder %s33, 0
      %p508 = por %p506, %p507
      %p509 = scmp.ne.s32.totalorder %s497, %s498
      %p510 = scmp.eq.s32.totalorder %s34, 1
      %p511 = por %p509, %p510
      %p513 = scmp.ne.s32.totalorder %s498, %s512
      %p514 = scmp.eq.s32.totalorder %s34, 0
      %p515 = por %p513, %p514
      %s517 = sadd.s32 %s516, 1
      %p520 = scmp.eq.s32.totalorder %s28, 1
      %p521 = scmp.ne.s32.totalorder %s516, %s518
      %p522 = scmp.eq.s32.totalorder %s28, 0
      %p523 = por %p521, %p522
      %p524 = scmp.ne.s32.totalorder %s516, %s518
      %p525 = scmp.eq.s32.totalorder %s33, 1
      %p526 = por %p524, %p525
      %p527 = scmp.ne.s32.totalorder %s518, %s519
      %p528 = scmp.eq.s32.totalorder %s33, 0
      %p529 = por %p527, %p528
      %p530 = scmp.ne.s32.totalorder %s518, %s519
      %p531 = scmp.eq.s32.totalorder %s34, 1
      %p532 = por %p530, %p531
      %p534 = scmp.ne.s32.totalorder %s519, %s533
      %p535 = scmp.eq.s32.totalorder %s34, 0
      %p536 = por %p534, %p535
      %s538 = sadd.s32 %s537, 1
      %p541 = scmp.eq.s32.totalorder %s28, 1
      %p542 = scmp.ne.s32.totalorder %s537, %s539
      %p543 = scmp.eq.s32.totalorder %s28, 0
      %p544 = por %p542, %p543
      %p545 = scmp.ne.s32.totalorder %s537, %s539
      %p546 = scmp.eq.s32.totalorder %s33, 1
      %p547 = por %p545, %p546
      %p548 = scmp.ne.s32.totalorder %s539, %s540
      %p549 = scmp.eq.s32.totalorder %s33, 0
      %p550 = por %p548, %p549
      %p551 = scmp.ne.s32.totalorder %s539, %s540
      %p552 = scmp.eq.s32.totalorder %s34, 1
      %p553 = por %p551, %p552
      %p555 = scmp.ne.s32.totalorder %s540, %s554
      %p556 = scmp.eq.s32.totalorder %s34, 0
      %p557 = por %p555, %p556
      %p558 = scmp.le.s32.totalorder 1, %s28
      %p559 = scmp.lt.s32.totalorder %s28, 3
      %p560 = pnand %p558, %p559
      %p561 = pneg %p560
      // Predicated region
      $region9: #{tpu_custom_call.1} parent=5 // pred_check
        _
      $region10: #{tpu_custom_call.1} parent=5 // pred_check_branch
        %563 = sbr.rel (%p560) target = $region12
      $region11: #{tpu_custom_call.1} parent=5 // pred_region
        %s564 = ssub.s32 %s28, 1
        // Predicated region
        $region13: #{tpu_custom_call.1} parent=11 // pred_check
          %p565 = pneg %p49
        $region14: #{tpu_custom_call.1} parent=11 // pred_check_branch
          %567 = sbr.rel (%p565) target = $region16
        $region15: #{tpu_custom_call.1} parent=11 // pred_region
          _
        $region16: #{tpu_custom_call.1} parent=11 // pred_fallthru
          _
        // Predicated region
        $region17: #{tpu_custom_call.1} parent=11 // pred_check
          %p568 = pneg %p70
        $region18: #{tpu_custom_call.1} parent=11 // pred_check_branch
          %570 = sbr.rel (%p568) target = $region20
        $region19: #{tpu_custom_call.1} parent=11 // pred_region
          _
        $region20: #{tpu_custom_call.1} parent=11 // pred_fallthru
          _
        // Predicated region
        $region21: #{tpu_custom_call.1} parent=11 // pred_check
          %p571 = pneg %p91
        $region22: #{tpu_custom_call.1} parent=11 // pred_check_branch
          %573 = sbr.rel (%p571) target = $region24
        $region23: #{tpu_custom_call.1} parent=11 // pred_region
          _
        $region24: #{tpu_custom_call.1} parent=11 // pred_fallthru
          _
        // Predicated region
        $region25: #{tpu_custom_call.1} parent=11 // pred_check
          %p574 = pneg %p112
        $region26: #{tpu_custom_call.1} parent=11 // pred_check_branch
          %576 = sbr.rel (%p574) target = $region28
        $region27: #{tpu_custom_call.1} parent=11 // pred_region
          _
        $region28: #{tpu_custom_call.1} parent=11 // pred_fallthru
          _
        // Predicated region
        $region29: #{tpu_custom_call.1} parent=11 // pred_check
          %p577 = pneg %p133
        $region30: #{tpu_custom_call.1} parent=11 // pred_check_branch
          %579 = sbr.rel (%p577) target = $region32
        $region31: #{tpu_custom_call.1} parent=11 // pred_region
          _
        $region32: #{tpu_custom_call.1} parent=11 // pred_fallthru
          _
        // Predicated region
        $region33: #{tpu_custom_call.1} parent=11 // pred_check
          %p580 = pneg %p154
        $region34: #{tpu_custom_call.1} parent=11 // pred_check_branch
          %582 = sbr.rel (%p580) target = $region36
        $region35: #{tpu_custom_call.1} parent=11 // pred_region
          _
        $region36: #{tpu_custom_call.1} parent=11 // pred_fallthru
          _
        // Predicated region
        $region37: #{tpu_custom_call.1} parent=11 // pred_check
          %p583 = pneg %p175
        $region38: #{tpu_custom_call.1} parent=11 // pred_check_branch
          %585 = sbr.rel (%p583) target = $region40
        $region39: #{tpu_custom_call.1} parent=11 // pred_region
          _
        $region40: #{tpu_custom_call.1} parent=11 // pred_fallthru
          _
        // Predicated region
        $region41: #{tpu_custom_call.1} parent=11 // pred_check
          %p586 = pneg %p508
        $region42: #{tpu_custom_call.1} parent=11 // pred_check_branch
          %588 = sbr.rel (%p586) target = $region44
        $region43: #{tpu_custom_call.1} parent=11 // pred_region
          _
        $region44: #{tpu_custom_call.1} parent=11 // pred_fallthru
          _
        // Predicated region
        $region45: #{tpu_custom_call.1} parent=11 // pred_check
          %p589 = pneg %p529
        $region46: #{tpu_custom_call.1} parent=11 // pred_check_branch
          %591 = sbr.rel (%p589) target = $region48
        $region47: #{tpu_custom_call.1} parent=11 // pred_region
          _
        $region48: #{tpu_custom_call.1} parent=11 // pred_fallthru
          _
      $region12: #{tpu_custom_call.1} parent=5 // pred_fallthru
        _
      %p592 = scmp.lt.s32.totalorder %s28, 2
      // Predicated region
      $region49: #{tpu_custom_call.1} parent=5 // pred_check
        %p593 = pneg %p592
      $region50: #{tpu_custom_call.1} parent=5 // pred_check_branch
        %595 = sbr.rel (%p593) target = $region52
      $region51: #{tpu_custom_call.1} parent=5 // pred_region
        // Predicated region
        $region53: #{tpu_custom_call.1} parent=51 // pred_check
          %p596 = pneg %p195
        $region54: #{tpu_custom_call.1} parent=51 // pred_check_branch
          %598 = sbr.rel (%p596) target = $region56
        $region55: #{tpu_custom_call.1} parent=51 // pred_region
          %p599 = scmp.lt.s32.totalorder %s28, 1
          %s600 = scalar_select %p599, %s28, 1
          %s601 = smul.addr %s600, 4
          %s602 = smul.addr %s601, 8
          %s603 = scalar_lea.vmem %s7, %s602
        $region56: #{tpu_custom_call.1} parent=51 // pred_fallthru
          _
        // Predicated region
        $region57: #{tpu_custom_call.1} parent=51 // pred_check
          %p604 = pneg %p221
        $region58: #{tpu_custom_call.1} parent=51 // pred_check_branch
          %606 = sbr.rel (%p604) target = $region60
        $region59: #{tpu_custom_call.1} parent=51 // pred_region
          %p607 = scmp.lt.s32.totalorder %s28, 1
          %s608 = scalar_select %p607, %s28, 1
          %s609 = scalar_lea.vmem %s8, %s608
        $region60: #{tpu_custom_call.1} parent=51 // pred_fallthru
          _
        // Predicated region
        $region61: #{tpu_custom_call.1} parent=51 // pred_check
          %p610 = pneg %p247
        $region62: #{tpu_custom_call.1} parent=51 // pred_check_branch
          %612 = sbr.rel (%p610) target = $region64
        $region63: #{tpu_custom_call.1} parent=51 // pred_region
          %p613 = scmp.lt.s32.totalorder %s28, 1
          %s614 = scalar_select %p613, %s28, 1
          %s615 = smul.addr %s614, 4
          %s616 = smul.addr %s615, 8
          %s617 = scalar_lea.vmem %s9, %s616
        $region64: #{tpu_custom_call.1} parent=51 // pred_fallthru
          _
        // Predicated region
        $region65: #{tpu_custom_call.1} parent=51 // pred_check
          %p618 = pneg %p273
        $region66: #{tpu_custom_call.1} parent=51 // pred_check_branch
          %620 = sbr.rel (%p618) target = $region68
        $region67: #{tpu_custom_call.1} parent=51 // pred_region
          %p621 = scmp.lt.s32.totalorder %s28, 1
          %s622 = scalar_select %p621, %s28, 1
          %s623 = scalar_lea.vmem %s10, %s622
        $region68: #{tpu_custom_call.1} parent=51 // pred_fallthru
          _
        // Predicated region
        $region69: #{tpu_custom_call.1} parent=51 // pred_check
          %p624 = pneg %p299
        $region70: #{tpu_custom_call.1} parent=51 // pred_check_branch
          %626 = sbr.rel (%p624) target = $region72
        $region71: #{tpu_custom_call.1} parent=51 // pred_region
          %p627 = scmp.lt.s32.totalorder %s28, 1
          %s628 = scalar_select %p627, %s28, 1
          %s629 = scalar_lea.vmem %s11, %s628
        $region72: #{tpu_custom_call.1} parent=51 // pred_fallthru
          _
        // Predicated region
        $region73: #{tpu_custom_call.1} parent=51 // pred_check
          %p630 = pneg %p325
        $region74: #{tpu_custom_call.1} parent=51 // pred_check_branch
          %632 = sbr.rel (%p630) target = $region76
        $region75: #{tpu_custom_call.1} parent=51 // pred_region
          %p633 = scmp.lt.s32.totalorder %s28, 1
          %s634 = scalar_select %p633, %s28, 1
          %s635 = scalar_lea.vmem %s12, %s634
        $region76: #{tpu_custom_call.1} parent=51 // pred_fallthru
          _
        // Predicated region
        $region77: #{tpu_custom_call.1} parent=51 // pred_check
          %p636 = pneg %p351
        $region78: #{tpu_custom_call.1} parent=51 // pred_check_branch
          %638 = sbr.rel (%p636) target = $region80
        $region79: #{tpu_custom_call.1} parent=51 // pred_region
          %p639 = scmp.lt.s32.totalorder %s28, 1
          %s640 = scalar_select %p639, %s28, 1
          %s641 = smul.addr %s640, 4
          %s642 = smul.addr %s641, 8
          %s643 = scalar_lea.vmem %s13, %s642
        $region80: #{tpu_custom_call.1} parent=51 // pred_fallthru
          _
        // Predicated region
        $region81: #{tpu_custom_call.1} parent=51 // pred_check
          %p644 = pneg %p377
        $region82: #{tpu_custom_call.1} parent=51 // pred_check_branch
          %646 = sbr.rel (%p644) target = $region84
        $region83: #{tpu_custom_call.1} parent=51 // pred_region
          %p647 = scmp.lt.s32.totalorder %s28, 1
          %s648 = scalar_select %p647, %s28, 1
          %s649 = scalar_lea.vmem %s14, %s648
        $region84: #{tpu_custom_call.1} parent=51 // pred_fallthru
          _
        // Predicated region
        $region85: #{tpu_custom_call.1} parent=51 // pred_check
          %p650 = pneg %p403
        $region86: #{tpu_custom_call.1} parent=51 // pred_check_branch
          %652 = sbr.rel (%p650) target = $region88
        $region87: #{tpu_custom_call.1} parent=51 // pred_region
          %p653 = scmp.lt.s32.totalorder %s28, 1
          %s654 = scalar_select %p653, %s28, 1
          %s655 = smul.addr %s654, 16
          %s656 = smul.addr %s655, 8
          %s657 = scalar_lea.vmem %s15, %s656
        $region88: #{tpu_custom_call.1} parent=51 // pred_fallthru
          _
        // Predicated region
        $region89: #{tpu_custom_call.1} parent=51 // pred_check
          %p658 = pneg %p429
        $region90: #{tpu_custom_call.1} parent=51 // pred_check_branch
          %660 = sbr.rel (%p658) target = $region92
        $region91: #{tpu_custom_call.1} parent=51 // pred_region
          %p661 = scmp.lt.s32.totalorder %s28, 1
          %s662 = scalar_select %p661, %s28, 1
          %s663 = scalar_lea.vmem %s16, %s662
        $region92: #{tpu_custom_call.1} parent=51 // pred_fallthru
          _
        // Predicated region
        $region93: #{tpu_custom_call.1} parent=51 // pred_check
          %p664 = pneg %p455
        $region94: #{tpu_custom_call.1} parent=51 // pred_check_branch
          %666 = sbr.rel (%p664) target = $region96
        $region95: #{tpu_custom_call.1} parent=51 // pred_region
          %p667 = scmp.lt.s32.totalorder %s28, 1
          %s668 = scalar_select %p667, %s28, 1
          %s669 = scalar_lea.vmem %s17, %s668
        $region96: #{tpu_custom_call.1} parent=51 // pred_fallthru
          _
        // Predicated region
        $region97: #{tpu_custom_call.1} parent=51 // pred_check
          %p670 = pneg %p481
        $region98: #{tpu_custom_call.1} parent=51 // pred_check_branch
          %672 = sbr.rel (%p670) target = $region100
        $region99: #{tpu_custom_call.1} parent=51 // pred_region
          %p673 = scmp.lt.s32.totalorder %s28, 1
          %s674 = scalar_select %p673, %s28, 1
          %s675 = scalar_lea.vmem %s18, %s674
        $region100: #{tpu_custom_call.1} parent=51 // pred_fallthru
          _
      $region52: #{tpu_custom_call.1} parent=5 // pred_fallthru
        _
      %p676 = scmp.le.s32.totalorder 1, %s28
      %p677 = scmp.lt.s32.totalorder %s28, 3
      %p678 = pnand %p676, %p677
      %p679 = pneg %p678
      // Predicated region
      $region101: #{tpu_custom_call.1} parent=5 // pred_check
        _
      $region102: #{tpu_custom_call.1} parent=5 // pred_check_branch
        %681 = sbr.rel (%p678) target = $region104
      $region103: #{tpu_custom_call.1} parent=5 // pred_region
        %s682 = ssub.s32 %s28, 1
        %p683 = pneg %p49
        %p684 = pneg %p46
        %p685 = pneg %p70
        %p686 = pneg %p67
        %p687 = pneg %p91
        %p688 = pneg %p88
        %p689 = pneg %p112
        %p690 = pneg %p109
        %p691 = pneg %p133
        %p692 = pneg %p130
        %p693 = pneg %p154
        %p694 = pneg %p151
        %p695 = pneg %p175
        %p696 = pneg %p172
        %p697 = scmp.lt.s32.totalorder %s33, 1
        %s698 = scalar_select %p697, %s33, 1
        %s699 = smul.addr %s698, 4
        %s700 = smul.addr %s699, 8
        %s701 = scalar_lea.vmem %s7, %s700
        %p702 = pneg %p201
        %p703 = pneg %p198
        %p704 = scmp.lt.s32.totalorder %s33, 1
        %s705 = scalar_select %p704, %s33, 1
        %s706 = scalar_lea.vmem %s8, %s705
        %p707 = pneg %p227
        %p708 = pneg %p224
        %p709 = scmp.lt.s32.totalorder %s33, 1
        %s710 = scalar_select %p709, %s33, 1
        %s711 = smul.addr %s710, 4
        %s712 = smul.addr %s711, 8
        %s713 = scalar_lea.vmem %s9, %s712
        %p714 = pneg %p253
        %p715 = pneg %p250
        %p716 = scmp.lt.s32.totalorder %s33, 1
        %s717 = scalar_select %p716, %s33, 1
        %s718 = scalar_lea.vmem %s10, %s717
        %p719 = pneg %p279
        %p720 = pneg %p276
        %p721 = scmp.lt.s32.totalorder %s33, 1
        %s722 = scalar_select %p721, %s33, 1
        %s723 = scalar_lea.vmem %s11, %s722
        %p724 = pneg %p305
        %p725 = pneg %p302
        %p726 = scmp.lt.s32.totalorder %s33, 1
        %s727 = scalar_select %p726, %s33, 1
        %s728 = scalar_lea.vmem %s12, %s727
        %p729 = pneg %p331
        %p730 = pneg %p328
        %p731 = scmp.lt.s32.totalorder %s33, 1
        %s732 = scalar_select %p731, %s33, 1
        %s733 = smul.addr %s732, 4
        %s734 = smul.addr %s733, 8
        %s735 = scalar_lea.vmem %s13, %s734
        %p736 = pneg %p357
        %p737 = pneg %p354
        %p738 = scmp.lt.s32.totalorder %s33, 1
        %s739 = scalar_select %p738, %s33, 1
        %s740 = scalar_lea.vmem %s14, %s739
        %p741 = pneg %p383
        %p742 = pneg %p380
        %p743 = scmp.lt.s32.totalorder %s33, 1
        %s744 = scalar_select %p743, %s33, 1
        %s745 = smul.addr %s744, 16
        %s746 = smul.addr %s745, 8
        %s747 = scalar_lea.vmem %s15, %s746
        %p748 = pneg %p409
        %p749 = pneg %p406
        %p750 = scmp.lt.s32.totalorder %s33, 1
        %s751 = scalar_select %p750, %s33, 1
        %s752 = scalar_lea.vmem %s16, %s751
        %p753 = pneg %p435
        %p754 = pneg %p432
        %p755 = scmp.lt.s32.totalorder %s33, 1
        %s756 = scalar_select %p755, %s33, 1
        %s757 = scalar_lea.vmem %s17, %s756
        %p758 = pneg %p461
        %p759 = pneg %p458
        %p760 = scmp.lt.s32.totalorder %s33, 1
        %s761 = scalar_select %p760, %s33, 1
        %s762 = scalar_lea.vmem %s18, %s761
        %p763 = pneg %p487
        %p764 = pneg %p484
        %p765 = pneg %p508
        %p766 = pneg %p505
        %p767 = pneg %p529
        %p768 = pneg %p526
        %p769 = pneg %p550
        %p770 = pneg %p547
        %p771 = scmp.lt.s32.totalorder %s33, 1
        %s772 = scalar_select %p771, %s33, 1
        %s773 = smul.addr %s772, 4
        %s774 = smul.addr %s773, 8
        %s775 = scalar_lea.vmem %s7, %s774
        %p776 = scmp.lt.s32.totalorder %s33, 1
        %s777 = scalar_select %p776, %s33, 1
        %s778 = scalar_lea.vmem %s8, %s777
        %p779 = scmp.lt.s32.totalorder %s33, 1
        %s780 = scalar_select %p779, %s33, 1
        %s781 = smul.addr %s780, 4
        %s782 = smul.addr %s781, 8
        %s783 = scalar_lea.vmem %s9, %s782
        %p784 = scmp.lt.s32.totalorder %s33, 1
        %s785 = scalar_select %p784, %s33, 1
        %s786 = scalar_lea.vmem %s10, %s785
        %p787 = scmp.lt.s32.totalorder %s33, 1
        %s788 = scalar_select %p787, %s33, 1
        %s789 = scalar_lea.vmem %s11, %s788
        %p790 = scmp.lt.s32.totalorder %s33, 1
        %s791 = scalar_select %p790, %s33, 1
        %s792 = scalar_lea.vmem %s12, %s791
        %p793 = scmp.lt.s32.totalorder %s33, 1
        %s794 = scalar_select %p793, %s33, 1
        %s795 = smul.addr %s794, 4
        %s796 = smul.addr %s795, 8
        %s797 = scalar_lea.vmem %s13, %s796
        %p798 = scmp.lt.s32.totalorder %s33, 1
        %s799 = scalar_select %p798, %s33, 1
        %s800 = scalar_lea.vmem %s14, %s799
        %p801 = scmp.lt.s32.totalorder %s33, 1
        %s802 = scalar_select %p801, %s33, 1
        %s803 = smul.addr %s802, 16
        %s804 = smul.addr %s803, 8
        %s805 = scalar_lea.vmem %s15, %s804
        %p806 = scmp.lt.s32.totalorder %s33, 1
        %s807 = scalar_select %p806, %s33, 1
        %s808 = scalar_lea.vmem %s16, %s807
        %p809 = scmp.lt.s32.totalorder %s33, 1
        %s810 = scalar_select %p809, %s33, 1
        %s811 = scalar_lea.vmem %s17, %s810
        %p812 = scmp.lt.s32.totalorder %s33, 1
        %s813 = scalar_select %p812, %s33, 1
        %s814 = scalar_lea.vmem %s18, %s813
        %p815 = scmp.eq.s32.totalorder %s33, 0
        // Predicated region
        $region105: #{tpu_custom_call.1} parent=103 // pred_check
          %p816 = pneg %p815
        $region106: #{tpu_custom_call.1} parent=103 // pred_check_branch
          %818 = sbr.rel (%p816) target = $region108
        $region107: #{tpu_custom_call.1} parent=103 // pred_region
          %v819 = vld [vmem:[%s0] sm:$0xff]
          %v820 = vld [vmem:[%s0 + $0x8] sm:$0xff]
          %v821 = vld [vmem:[%s1] sm:$0xff]
          %v822 = vld [vmem:[%s1 + $0x8] sm:$0xff]
          %v823 = vadd.f32 %v819, %v821
          %v824 = vadd.f32 %v820, %v822
          %v825 = vld [vmem:[%s2] sm:$0x1]
          %v827 = vperm.slane %v825, 0
          %v829 = vmul.f32 %v823, %v827
          %v830 = vmul.f32 %v824, %v827
          %v831 = vld [vmem:[%s5] sm:$0xff]
          %v832 = vld [vmem:[%s6] sm:$0x1]
          %v834 = vperm.slane %v832, 0
          %vm836 = vcmask 64512
          %v838 = vsel %vm836, %v829, 0
          %v841 = vsel %vm836, %v830, 0
          %843 = vmatpush.msra.mxu0 0.0
          %844 = vmatpush.msra.mxu0 0.0
          %845 = vmatpush.msra.mxu0 0.0
          %846 = vmatpush.msra.mxu0 0.0
          %847 = vmatpush.msra.mxu0 0.0
          %848 = vmatpush.msra.mxu0 0.0
          %849 = vmatpush.msra.mxu0 0.0
          %850 = vmatpush.msra.mxu0 0.0
          %851 = vmatpush.msra.mxu0 0.0
          %852 = vmatpush.msra.mxu0 0.0
          %853 = vmatpush.msra.mxu0 0.0
          %854 = vmatpush.msra.mxu0 0.0
          %855 = vmatpush.msra.mxu0 0.0
          %856 = vmatpush.msra.mxu0 0.0
          %857 = vmatpush.msra.mxu0 0.0
          %858 = vmatpush.msra.mxu0 %v831
          %859 = vmatmul.f32.gmra.mxu0 %v838
          %v860 = vpop.f32.mrf.mxu0
          %v861 = vadd.f32 %v834, %v860
          %862 = vmatmul.f32.gmra.mxu0 %v841
          %v863 = vpop.f32.mrf.mxu0
          %v864 = vadd.f32 %v834, %v863
          %865 = vdwg.mxu0
          %v866 = vld [vmem:[%s3] sm:$0xff]
          %v867 = vld [vmem:[%s3 + $0x8] sm:$0xff]
          %v868 = vadd.f32 %v861, %v866
          %v869 = vadd.f32 %v864, %v867
          %vm870 = vcmask 261120
          %871 = vst.msk [vmem:[#allocation2] sm:$0xff] %vm870, %v868
          %872 = vst.msk [vmem:[#allocation2 + $0x8] sm:$0xff] %vm870, %v869
        $region108: #{tpu_custom_call.1} parent=103 // pred_fallthru
          _
        %v873 = vld [vmem:[#allocation2] sm:$0xff]
        %v874 = vld [vmem:[#allocation2 + $0x8] sm:$0xff]
        %v875 = vld [vmem:[%s4] sm:$0x1]
        %v876 = vld [vmem:[%s4 + $0x1] sm:$0x1]
        %v877 = vld [vmem:[%s775] sm:$0xff]
        %v878 = vld [vmem:[%s775 + $0x8] sm:$0xff]
        %v879 = vld [vmem:[%s775 + $0x10] sm:$0xff]
        %v880 = vld [vmem:[%s775 + $0x18] sm:$0xff]
        %v881 = vld [vmem:[%s778] sm:$0x1]
        %v883 = vperm.slane %v881, 0
        %vm885 = vcmask 261120
        %v887 = vsel %vm885, %v873, 0
        %v890 = vsel %vm885, %v874, 0
        %892 = vmatpush.msra.mxu0 0.0
        %893 = vmatpush.msra.mxu0 0.0
        %894 = vmatpush.msra.mxu0 0.0
        %895 = vmatpush.msra.mxu0 0.0
        %896 = vmatpush.msra.mxu0 0.0
        %897 = vmatpush.msra.mxu0 0.0
        %898 = vmatpush.msra.mxu0 0.0
        %899 = vmatpush.msra.mxu0 0.0
        %900 = vmatpush.msra.mxu0 0.0
        %901 = vmatpush.msra.mxu0 0.0
        %902 = vmatpush.msra.mxu0 0.0
        %903 = vmatpush.msra.mxu0 0.0
        %904 = vmatpush.msra.mxu0 %v880
        %905 = vmatpush.msra.mxu0 %v879
        %906 = vmatpush.msra.mxu0 %v878
        %907 = vmatpush.msra.mxu0 %v877
        %908 = vmatmul.f32.gmra.mxu0 %v887
        %v909 = vpop.f32.mrf.mxu0
        %v910 = vadd.f32 %v883, %v909
        %911 = vmatmul.f32.gmra.mxu0 %v890
        %v912 = vpop.f32.mrf.mxu0
        %v913 = vadd.f32 %v883, %v912
        %914 = vdwg.mxu0
        %vm915 = vcmask 785408
        %916 = vst.msk [vmem:[#allocation3] sm:$0xff] %vm915, %v910
        %917 = vst.msk [vmem:[#allocation3 + $0x8] sm:$0xff] %vm915, %v913
        %v918 = vld [vmem:[#allocation3] sm:$0xff]
        %v919 = vld [vmem:[#allocation3 + $0x8] sm:$0xff]
        %921 = vrot.lane.b32.xlu0 %v918, 96
        %v922 = vpop.permute.xlu0 %921
        %vm923 = vcmask 64512
        %v924 = vsel %vm923, %v918, 0
        %v926 = vsel %vm923, %v922, 0
        %928 = vmatpush.xpose.msra.mxu0 0.0
        %929 = vmatpush.xpose.msra.mxu0 0.0
        %930 = vmatpush.xpose.msra.mxu0 0.0
        %931 = vmatpush.xpose.msra.mxu0 0.0
        %932 = vmatpush.xpose.msra.mxu0 0.0
        %933 = vmatpush.xpose.msra.mxu0 0.0
        %934 = vmatpush.xpose.msra.mxu0 0.0
        %935 = vmatpush.xpose.msra.mxu0 0.0
        %936 = vmatpush.xpose.msra.mxu0 0.0
        %937 = vmatpush.xpose.msra.mxu0 0.0
        %938 = vmatpush.xpose.msra.mxu0 0.0
        %939 = vmatpush.xpose.msra.mxu0 0.0
        %940 = vmatpush.xpose.msra.mxu0 0.0
        %941 = vmatpush.xpose.msra.mxu0 0.0
        %942 = vmatpush.xpose.msra.mxu0 0.0
        %943 = vmatpush.xpose.msra.mxu0 %v926
        %944 = vmatmul.f32.gmra.mxu0 %v924
        %v945 = vpop.f32.mrf.mxu0
        %v946 = vadd.f32 0.0, %v945
        %947 = vdwg.mxu0
        %949 = vrot.lane.b32.xlu0 %v919, 96
        %v950 = vpop.permute.xlu0 %949
        %v951 = vsel %vm923, %v919, 0
        %v953 = vsel %vm923, %v950, 0
        %955 = vmatpush.xpose.msra.mxu0 0.0
        %956 = vmatpush.xpose.msra.mxu0 0.0
        %957 = vmatpush.xpose.msra.mxu0 0.0
        %958 = vmatpush.xpose.msra.mxu0 0.0
        %959 = vmatpush.xpose.msra.mxu0 0.0
        %960 = vmatpush.xpose.msra.mxu0 0.0
        %961 = vmatpush.xpose.msra.mxu0 0.0
        %962 = vmatpush.xpose.msra.mxu0 0.0
        %963 = vmatpush.xpose.msra.mxu0 0.0
        %964 = vmatpush.xpose.msra.mxu0 0.0
        %965 = vmatpush.xpose.msra.mxu0 0.0
        %966 = vmatpush.xpose.msra.mxu0 0.0
        %967 = vmatpush.xpose.msra.mxu0 0.0
        %968 = vmatpush.xpose.msra.mxu0 0.0
        %969 = vmatpush.xpose.msra.mxu0 0.0
        %970 = vmatpush.xpose.msra.mxu0 %v953
        %971 = vmatmul.f32.gmra.mxu0 %v951
        %v972 = vpop.f32.mrf.mxu0
        %v973 = vadd.f32 0.0, %v972
        %974 = vdwg.mxu0
        %v975 = vmul.f32 %v946, 0.35355338
        %v976 = vmul.f32 %v973, 0.35355338
        %v979 = vperm.slane %v875, 0
        %v980 = vperm.slane %v876, 0
        %v983 = vadd.f32 %v975, %v979
        %v984 = vadd.f32 %v976, %v980
        %v985 = vsel %vm923, %v983, -inf
        %986 = vmax.xlane.f32.xlu0 %v985
        %v987 = vpop.xlane.xlu0 %986
        %v988 = vsel %vm923, %v984, -inf
        %989 = vmax.xlane.f32.xlu0 %v988
        %v990 = vpop.xlane.xlu0 %989
        %v991 = vsub.f32 %v983, %v987
        %v992 = vsub.f32 %v984, %v990
        %v993 = vmul.f32 %v991, 1.442695
        %v994 = vpow.pop %v993
        %v995 = vmul.f32 %v992, 1.442695
        %v996 = vpow.pop %v995
        %v997 = vsel %vm923, %v994, 0.0
        %998 = vadd.xlane.f32.xlu0 %v997
        %v999 = vpop.xlane.xlu0 %998
        %v1000 = vsel %vm923, %v996, 0.0
        %1001 = vadd.xlane.f32.xlu0 %v1000
        %v1002 = vpop.xlane.xlu0 %1001
        %v1003 = vrcp.pop %v999
        %v1004 = vrcp.pop %v1002
        %v1005 = vmul.f32 %v994, %v1003
        %v1006 = vmul.f32 %v996, %v1004
        %1007 = vrot.lane.b32.xlu0 %v918, 64
        %v1008 = vpop.permute.xlu0 %1007
        %v1011 = vsel %vm923, %v1005, 0
        %1013 = vmatpush.msra.mxu0 0.0
        %1014 = vmatpush.msra.mxu0 0.0
        %1015 = vmatpush.msra.mxu0 0.0
        %1016 = vmatpush.msra.mxu0 0.0
        %1017 = vmatpush.msra.mxu0 0.0
        %1018 = vmatpush.msra.mxu0 0.0
        %1019 = vmatpush.msra.mxu0 0.0
        %1020 = vmatpush.msra.mxu0 0.0
        %1021 = vmatpush.msra.mxu0 0.0
        %1022 = vmatpush.msra.mxu0 0.0
        %1023 = vmatpush.msra.mxu0 0.0
        %1024 = vmatpush.msra.mxu0 0.0
        %1025 = vmatpush.msra.mxu0 0.0
        %1026 = vmatpush.msra.mxu0 0.0
        %1027 = vmatpush.msra.mxu0 0.0
        %1028 = vmatpush.msra.mxu0 %v1008
        %1029 = vmatmul.f32.gmra.mxu0 %v1011
        %v1030 = vpop.f32.mrf.mxu0
        %v1031 = vadd.f32 0.0, %v1030
        %1032 = vdwg.mxu0
        %1033 = vrot.lane.b32.xlu0 %v919, 64
        %v1034 = vpop.permute.xlu0 %1033
        %v1037 = vsel %vm923, %v1006, 0
        %1039 = vmatpush.msra.mxu0 0.0
        %1040 = vmatpush.msra.mxu0 0.0
        %1041 = vmatpush.msra.mxu0 0.0
        %1042 = vmatpush.msra.mxu0 0.0
        %1043 = vmatpush.msra.mxu0 0.0
        %1044 = vmatpush.msra.mxu0 0.0
        %1045 = vmatpush.msra.mxu0 0.0
        %1046 = vmatpush.msra.mxu0 0.0
        %1047 = vmatpush.msra.mxu0 0.0
        %1048 = vmatpush.msra.mxu0 0.0
        %1049 = vmatpush.msra.mxu0 0.0
        %1050 = vmatpush.msra.mxu0 0.0
        %1051 = vmatpush.msra.mxu0 0.0
        %1052 = vmatpush.msra.mxu0 0.0
        %1053 = vmatpush.msra.mxu0 0.0
        %1054 = vmatpush.msra.mxu0 %v1034
        %1055 = vmatmul.f32.gmra.mxu0 %v1037
        %v1056 = vpop.f32.mrf.mxu0
        %v1057 = vadd.f32 0.0, %v1056
        %1058 = vdwg.mxu0
        %1059 = vst.msk [vmem:[#allocation4] sm:$0xff] %vm923, %v1031
        %1060 = vst.msk [vmem:[#allocation4 + $0x8] sm:$0xff] %vm923, %v1057
        %v1061 = vld [vmem:[#allocation3] sm:$0xff]
        %v1062 = vld [vmem:[#allocation3 + $0x8] sm:$0xff]
        %1064 = vrot.lane.b32.xlu0 %v1061, 120
        %v1065 = vpop.permute.xlu0 %1064
        %1066 = vrot.lane.b32.xlu0 %v1061, 88
        %v1067 = vpop.permute.xlu0 %1066
        %v1068 = vsel %vm923, %v1065, 0
        %v1070 = vsel %vm923, %v1067, 0
        %1072 = vmatpush.xpose.msra.mxu0 0.0
        %1073 = vmatpush.xpose.msra.mxu0 0.0
        %1074 = vmatpush.xpose.msra.mxu0 0.0
        %1075 = vmatpush.xpose.msra.mxu0 0.0
        %1076 = vmatpush.xpose.msra.mxu0 0.0
        %1077 = vmatpush.xpose.msra.mxu0 0.0
        %1078 = vmatpush.xpose.msra.mxu0 0.0
        %1079 = vmatpush.xpose.msra.mxu0 0.0
        %1080 = vmatpush.xpose.msra.mxu0 0.0
        %1081 = vmatpush.xpose.msra.mxu0 0.0
        %1082 = vmatpush.xpose.msra.mxu0 0.0
        %1083 = vmatpush.xpose.msra.mxu0 0.0
        %1084 = vmatpush.xpose.msra.mxu0 0.0
        %1085 = vmatpush.xpose.msra.mxu0 0.0
        %1086 = vmatpush.xpose.msra.mxu0 0.0
        %1087 = vmatpush.xpose.msra.mxu0 %v1070
        %1088 = vmatmul.f32.gmra.mxu0 %v1068
        %v1089 = vpop.f32.mrf.mxu0
        %v1090 = vadd.f32 0.0, %v1089
        %1091 = vdwg.mxu0
        %1093 = vrot.lane.b32.xlu0 %v1062, 120
        %v1094 = vpop.permute.xlu0 %1093
        %1095 = vrot.lane.b32.xlu0 %v1062, 88
        %v1096 = vpop.permute.xlu0 %1095
        %v1097 = vsel %vm923, %v1094, 0
        %v1099 = vsel %vm923, %v1096, 0
        %1101 = vmatpush.xpose.msra.mxu0 0.0
        %1102 = vmatpush.xpose.msra.mxu0 0.0
        %1103 = vmatpush.xpose.msra.mxu0 0.0
        %1104 = vmatpush.xpose.msra.mxu0 0.0
        %1105 = vmatpush.xpose.msra.mxu0 0.0
        %1106 = vmatpush.xpose.msra.mxu0 0.0
        %1107 = vmatpush.xpose.msra.mxu0 0.0
        %1108 = vmatpush.xpose.msra.mxu0 0.0
        %1109 = vmatpush.xpose.msra.mxu0 0.0
        %1110 = vmatpush.xpose.msra.mxu0 0.0
        %1111 = vmatpush.xpose.msra.mxu0 0.0
        %1112 = vmatpush.xpose.msra.mxu0 0.0
        %1113 = vmatpush.xpose.msra.mxu0 0.0
        %1114 = vmatpush.xpose.msra.mxu0 0.0
        %1115 = vmatpush.xpose.msra.mxu0 0.0
        %1116 = vmatpush.xpose.msra.mxu0 %v1099
        %1117 = vmatmul.f32.gmra.mxu0 %v1097
        %v1118 = vpop.f32.mrf.mxu0
        %v1119 = vadd.f32 0.0, %v1118
        %1120 = vdwg.mxu0
        %v1121 = vmul.f32 %v1090, 0.35355338
        %v1122 = vmul.f32 %v1119, 0.35355338
        %v1123 = vadd.f32 %v1121, %v979
        %v1124 = vadd.f32 %v1122, %v980
        %v1125 = vsel %vm923, %v1123, -inf
        %1126 = vmax.xlane.f32.xlu0 %v1125
        %v1127 = vpop.xlane.xlu0 %1126
        %v1128 = vsel %vm923, %v1124, -inf
        %1129 = vmax.xlane.f32.xlu0 %v1128
        %v1130 = vpop.xlane.xlu0 %1129
        %v1131 = vsub.f32 %v1123, %v1127
        %v1132 = vsub.f32 %v1124, %v1130
        %v1133 = vmul.f32 %v1131, 1.442695
        %v1134 = vpow.pop %v1133
        %v1135 = vmul.f32 %v1132, 1.442695
        %v1136 = vpow.pop %v1135
        %v1137 = vsel %vm923, %v1134, 0.0
        %1138 = vadd.xlane.f32.xlu0 %v1137
        %v1139 = vpop.xlane.xlu0 %1138
        %v1140 = vsel %vm923, %v1136, 0.0
        %1141 = vadd.xlane.f32.xlu0 %v1140
        %v1142 = vpop.xlane.xlu0 %1141
        %v1143 = vrcp.pop %v1139
        %v1144 = vrcp.pop %v1142
        %v1145 = vmul.f32 %v1134, %v1143
        %v1146 = vmul.f32 %v1136, %v1144
        %1147 = vrot.lane.b32.xlu0 %v1061, 56
        %v1148 = vpop.permute.xlu0 %1147
        %v1151 = vsel %vm923, %v1145, 0
        %1153 = vmatpush.msra.mxu0 0.0
        %1154 = vmatpush.msra.mxu0 0.0
        %1155 = vmatpush.msra.mxu0 0.0
        %1156 = vmatpush.msra.mxu0 0.0
        %1157 = vmatpush.msra.mxu0 0.0
        %1158 = vmatpush.msra.mxu0 0.0
        %1159 = vmatpush.msra.mxu0 0.0
        %1160 = vmatpush.msra.mxu0 0.0
        %1161 = vmatpush.msra.mxu0 0.0
        %1162 = vmatpush.msra.mxu0 0.0
        %1163 = vmatpush.msra.mxu0 0.0
        %1164 = vmatpush.msra.mxu0 0.0
        %1165 = vmatpush.msra.mxu0 0.0
        %1166 = vmatpush.msra.mxu0 0.0
        %1167 = vmatpush.msra.mxu0 0.0
        %1168 = vmatpush.msra.mxu0 %v1148
        %1169 = vmatmul.f32.gmra.mxu0 %v1151
        %v1170 = vpop.f32.mrf.mxu0
        %v1171 = vadd.f32 0.0, %v1170
        %1172 = vdwg.mxu0
        %1173 = vrot.lane.b32.xlu0 %v1062, 56
        %v1174 = vpop.permute.xlu0 %1173
        %v1177 = vsel %vm923, %v1146, 0
        %1179 = vmatpush.msra.mxu0 0.0
        %1180 = vmatpush.msra.mxu0 0.0
        %1181 = vmatpush.msra.mxu0 0.0
        %1182 = vmatpush.msra.mxu0 0.0
        %1183 = vmatpush.msra.mxu0 0.0
        %1184 = vmatpush.msra.mxu0 0.0
        %1185 = vmatpush.msra.mxu0 0.0
        %1186 = vmatpush.msra.mxu0 0.0
        %1187 = vmatpush.msra.mxu0 0.0
        %1188 = vmatpush.msra.mxu0 0.0
        %1189 = vmatpush.msra.mxu0 0.0
        %1190 = vmatpush.msra.mxu0 0.0
        %1191 = vmatpush.msra.mxu0 0.0
        %1192 = vmatpush.msra.mxu0 0.0
        %1193 = vmatpush.msra.mxu0 0.0
        %1194 = vmatpush.msra.mxu0 %v1174
        %1195 = vmatmul.f32.gmra.mxu0 %v1177
        %v1196 = vpop.f32.mrf.mxu0
        %v1197 = vadd.f32 0.0, %v1196
        %1198 = vdwg.mxu0
        %1201 = vrot.lane.b32.xlu0 %v1171, 8
        %v1202 = vpop.permute.xlu0 %1201
        %1203 = vrot.lane.b32.xlu0 %v1197, 8
        %v1204 = vpop.permute.xlu0 %1203
        %vm1207 = vcmask 130112
        %1208 = vst.msk [vmem:[#allocation4] sm:$0xff] %vm1207, %v1202
        %1209 = vst.msk [vmem:[#allocation4 + $0x8] sm:$0xff] %vm1207, %v1204
        %v1210 = vld [vmem:[#allocation3] sm:$0xff]
        %v1211 = vld [vmem:[#allocation3 + $0x8] sm:$0xff]
        %1213 = vrot.lane.b32.xlu0 %v1210, 112
        %v1214 = vpop.permute.xlu0 %1213
        %1215 = vrot.lane.b32.xlu0 %v1210, 80
        %v1216 = vpop.permute.xlu0 %1215
        %v1217 = vsel %vm923, %v1214, 0
        %v1219 = vsel %vm923, %v1216, 0
        %1221 = vmatpush.xpose.msra.mxu0 0.0
        %1222 = vmatpush.xpose.msra.mxu0 0.0
        %1223 = vmatpush.xpose.msra.mxu0 0.0
        %1224 = vmatpush.xpose.msra.mxu0 0.0
        %1225 = vmatpush.xpose.msra.mxu0 0.0
        %1226 = vmatpush.xpose.msra.mxu0 0.0
        %1227 = vmatpush.xpose.msra.mxu0 0.0
        %1228 = vmatpush.xpose.msra.mxu0 0.0
        %1229 = vmatpush.xpose.msra.mxu0 0.0
        %1230 = vmatpush.xpose.msra.mxu0 0.0
        %1231 = vmatpush.xpose.msra.mxu0 0.0
        %1232 = vmatpush.xpose.msra.mxu0 0.0
        %1233 = vmatpush.xpose.msra.mxu0 0.0
        %1234 = vmatpush.xpose.msra.mxu0 0.0
        %1235 = vmatpush.xpose.msra.mxu0 0.0
        %1236 = vmatpush.xpose.msra.mxu0 %v1219
        %1237 = vmatmul.f32.gmra.mxu0 %v1217
        %v1238 = vpop.f32.mrf.mxu0
        %v1239 = vadd.f32 0.0, %v1238
        %1240 = vdwg.mxu0
        %1242 = vrot.lane.b32.xlu0 %v1211, 112
        %v1243 = vpop.permute.xlu0 %1242
        %1244 = vrot.lane.b32.xlu0 %v1211, 80
        %v1245 = vpop.permute.xlu0 %1244
        %v1246 = vsel %vm923, %v1243, 0
        %v1248 = vsel %vm923, %v1245, 0
        %1250 = vmatpush.xpose.msra.mxu0 0.0
        %1251 = vmatpush.xpose.msra.mxu0 0.0
        %1252 = vmatpush.xpose.msra.mxu0 0.0
        %1253 = vmatpush.xpose.msra.mxu0 0.0
        %1254 = vmatpush.xpose.msra.mxu0 0.0
        %1255 = vmatpush.xpose.msra.mxu0 0.0
        %1256 = vmatpush.xpose.msra.mxu0 0.0
        %1257 = vmatpush.xpose.msra.mxu0 0.0
        %1258 = vmatpush.xpose.msra.mxu0 0.0
        %1259 = vmatpush.xpose.msra.mxu0 0.0
        %1260 = vmatpush.xpose.msra.mxu0 0.0
        %1261 = vmatpush.xpose.msra.mxu0 0.0
        %1262 = vmatpush.xpose.msra.mxu0 0.0
        %1263 = vmatpush.xpose.msra.mxu0 0.0
        %1264 = vmatpush.xpose.msra.mxu0 0.0
        %1265 = vmatpush.xpose.msra.mxu0 %v1248
        %1266 = vmatmul.f32.gmra.mxu0 %v1246
        %v1267 = vpop.f32.mrf.mxu0
        %v1268 = vadd.f32 0.0, %v1267
        %1269 = vdwg.mxu0
        %v1270 = vmul.f32 %v1239, 0.35355338
        %v1271 = vmul.f32 %v1268, 0.35355338
        %v1272 = vadd.f32 %v1270, %v979
        %v1273 = vadd.f32 %v1271, %v980
        %v1274 = vsel %vm923, %v1272, -inf
        %1275 = vmax.xlane.f32.xlu0 %v1274
        %v1276 = vpop.xlane.xlu0 %1275
        %v1277 = vsel %vm923, %v1273, -inf
        %1278 = vmax.xlane.f32.xlu0 %v1277
        %v1279 = vpop.xlane.xlu0 %1278
        %v1280 = vsub.f32 %v1272, %v1276
        %v1281 = vsub.f32 %v1273, %v1279
        %v1282 = vmul.f32 %v1280, 1.442695
        %v1283 = vpow.pop %v1282
        %v1284 = vmul.f32 %v1281, 1.442695
        %v1285 = vpow.pop %v1284
        %v1286 = vsel %vm923, %v1283, 0.0
        %1287 = vadd.xlane.f32.xlu0 %v1286
        %v1288 = vpop.xlane.xlu0 %1287
        %v1289 = vsel %vm923, %v1285, 0.0
        %1290 = vadd.xlane.f32.xlu0 %v1289
        %v1291 = vpop.xlane.xlu0 %1290
        %v1292 = vrcp.pop %v1288
        %v1293 = vrcp.pop %v1291
        %v1294 = vmul.f32 %v1283, %v1292
        %v1295 = vmul.f32 %v1285, %v1293
        %1296 = vrot.lane.b32.xlu0 %v1210, 48
        %v1297 = vpop.permute.xlu0 %1296
        %v1300 = vsel %vm923, %v1294, 0
        %1302 = vmatpush.msra.mxu0 0.0
        %1303 = vmatpush.msra.mxu0 0.0
        %1304 = vmatpush.msra.mxu0 0.0
        %1305 = vmatpush.msra.mxu0 0.0
        %1306 = vmatpush.msra.mxu0 0.0
        %1307 = vmatpush.msra.mxu0 0.0
        %1308 = vmatpush.msra.mxu0 0.0
        %1309 = vmatpush.msra.mxu0 0.0
        %1310 = vmatpush.msra.mxu0 0.0
        %1311 = vmatpush.msra.mxu0 0.0
        %1312 = vmatpush.msra.mxu0 0.0
        %1313 = vmatpush.msra.mxu0 0.0
        %1314 = vmatpush.msra.mxu0 0.0
        %1315 = vmatpush.msra.mxu0 0.0
        %1316 = vmatpush.msra.mxu0 0.0
        %1317 = vmatpush.msra.mxu0 %v1297
        %1318 = vmatmul.f32.gmra.mxu0 %v1300
        %v1319 = vpop.f32.mrf.mxu0
        %v1320 = vadd.f32 0.0, %v1319
        %1321 = vdwg.mxu0
        %1322 = vrot.lane.b32.xlu0 %v1211, 48
        %v1323 = vpop.permute.xlu0 %1322
        %v1326 = vsel %vm923, %v1295, 0
        %1328 = vmatpush.msra.mxu0 0.0
        %1329 = vmatpush.msra.mxu0 0.0
        %1330 = vmatpush.msra.mxu0 0.0
        %1331 = vmatpush.msra.mxu0 0.0
        %1332 = vmatpush.msra.mxu0 0.0
        %1333 = vmatpush.msra.mxu0 0.0
        %1334 = vmatpush.msra.mxu0 0.0
        %1335 = vmatpush.msra.mxu0 0.0
        %1336 = vmatpush.msra.mxu0 0.0
        %1337 = vmatpush.msra.mxu0 0.0
        %1338 = vmatpush.msra.mxu0 0.0
        %1339 = vmatpush.msra.mxu0 0.0
        %1340 = vmatpush.msra.mxu0 0.0
        %1341 = vmatpush.msra.mxu0 0.0
        %1342 = vmatpush.msra.mxu0 0.0
        %1343 = vmatpush.msra.mxu0 %v1323
        %1344 = vmatmul.f32.gmra.mxu0 %v1326
        %v1345 = vpop.f32.mrf.mxu0
        %v1346 = vadd.f32 0.0, %v1345
        %1347 = vdwg.mxu0
        %1350 = vrot.lane.b32.xlu0 %v1320, 16
        %v1351 = vpop.permute.xlu0 %1350
        %1352 = vrot.lane.b32.xlu0 %v1346, 16
        %v1353 = vpop.permute.xlu0 %1352
        %vm1356 = vcmask 195712
        %1357 = vst.msk [vmem:[#allocation4] sm:$0xff] %vm1356, %v1351
        %1358 = vst.msk [vmem:[#allocation4 + $0x8] sm:$0xff] %vm1356, %v1353
        %v1359 = vld [vmem:[#allocation3] sm:$0xff]
        %v1360 = vld [vmem:[#allocation3 + $0x8] sm:$0xff]
        %1362 = vrot.lane.b32.xlu0 %v1359, 104
        %v1363 = vpop.permute.xlu0 %1362
        %1364 = vrot.lane.b32.xlu0 %v1359, 72
        %v1365 = vpop.permute.xlu0 %1364
        %v1366 = vsel %vm923, %v1363, 0
        %v1368 = vsel %vm923, %v1365, 0
        %1370 = vmatpush.xpose.msra.mxu0 0.0
        %1371 = vmatpush.xpose.msra.mxu0 0.0
        %1372 = vmatpush.xpose.msra.mxu0 0.0
        %1373 = vmatpush.xpose.msra.mxu0 0.0
        %1374 = vmatpush.xpose.msra.mxu0 0.0
        %1375 = vmatpush.xpose.msra.mxu0 0.0
        %1376 = vmatpush.xpose.msra.mxu0 0.0
        %1377 = vmatpush.xpose.msra.mxu0 0.0
        %1378 = vmatpush.xpose.msra.mxu0 0.0
        %1379 = vmatpush.xpose.msra.mxu0 0.0
        %1380 = vmatpush.xpose.msra.mxu0 0.0
        %1381 = vmatpush.xpose.msra.mxu0 0.0
        %1382 = vmatpush.xpose.msra.mxu0 0.0
        %1383 = vmatpush.xpose.msra.mxu0 0.0
        %1384 = vmatpush.xpose.msra.mxu0 0.0
        %1385 = vmatpush.xpose.msra.mxu0 %v1368
        %1386 = vmatmul.f32.gmra.mxu0 %v1366
        %v1387 = vpop.f32.mrf.mxu0
        %v1388 = vadd.f32 0.0, %v1387
        %1389 = vdwg.mxu0
        %1391 = vrot.lane.b32.xlu0 %v1360, 104
        %v1392 = vpop.permute.xlu0 %1391
        %1393 = vrot.lane.b32.xlu0 %v1360, 72
        %v1394 = vpop.permute.xlu0 %1393
        %v1395 = vsel %vm923, %v1392, 0
        %v1397 = vsel %vm923, %v1394, 0
        %1399 = vmatpush.xpose.msra.mxu0 0.0
        %1400 = vmatpush.xpose.msra.mxu0 0.0
        %1401 = vmatpush.xpose.msra.mxu0 0.0
        %1402 = vmatpush.xpose.msra.mxu0 0.0
        %1403 = vmatpush.xpose.msra.mxu0 0.0
        %1404 = vmatpush.xpose.msra.mxu0 0.0
        %1405 = vmatpush.xpose.msra.mxu0 0.0
        %1406 = vmatpush.xpose.msra.mxu0 0.0
        %1407 = vmatpush.xpose.msra.mxu0 0.0
        %1408 = vmatpush.xpose.msra.mxu0 0.0
        %1409 = vmatpush.xpose.msra.mxu0 0.0
        %1410 = vmatpush.xpose.msra.mxu0 0.0
        %1411 = vmatpush.xpose.msra.mxu0 0.0
        %1412 = vmatpush.xpose.msra.mxu0 0.0
        %1413 = vmatpush.xpose.msra.mxu0 0.0
        %1414 = vmatpush.xpose.msra.mxu0 %v1397
        %1415 = vmatmul.f32.gmra.mxu0 %v1395
        %v1416 = vpop.f32.mrf.mxu0
        %v1417 = vadd.f32 0.0, %v1416
        %1418 = vdwg.mxu0
        %v1419 = vmul.f32 %v1388, 0.35355338
        %v1420 = vmul.f32 %v1417, 0.35355338
        %v1421 = vadd.f32 %v1419, %v979
        %v1422 = vadd.f32 %v1420, %v980
        %v1423 = vsel %vm923, %v1421, -inf
        %1424 = vmax.xlane.f32.xlu0 %v1423
        %v1425 = vpop.xlane.xlu0 %1424
        %v1426 = vsel %vm923, %v1422, -inf
        %1427 = vmax.xlane.f32.xlu0 %v1426
        %v1428 = vpop.xlane.xlu0 %1427
        %v1429 = vsub.f32 %v1421, %v1425
        %v1430 = vsub.f32 %v1422, %v1428
        %v1431 = vmul.f32 %v1429, 1.442695
        %v1432 = vpow.pop %v1431
        %v1433 = vmul.f32 %v1430, 1.442695
        %v1434 = vpow.pop %v1433
        %v1435 = vsel %vm923, %v1432, 0.0
        %1436 = vadd.xlane.f32.xlu0 %v1435
        %v1437 = vpop.xlane.xlu0 %1436
        %v1438 = vsel %vm923, %v1434, 0.0
        %1439 = vadd.xlane.f32.xlu0 %v1438
        %v1440 = vpop.xlane.xlu0 %1439
        %v1441 = vrcp.pop %v1437
        %v1442 = vrcp.pop %v1440
        %v1443 = vmul.f32 %v1432, %v1441
        %v1444 = vmul.f32 %v1434, %v1442
        %1445 = vrot.lane.b32.xlu0 %v1359, 40
        %v1446 = vpop.permute.xlu0 %1445
        %v1449 = vsel %vm923, %v1443, 0
        %1451 = vmatpush.msra.mxu0 0.0
        %1452 = vmatpush.msra.mxu0 0.0
        %1453 = vmatpush.msra.mxu0 0.0
        %1454 = vmatpush.msra.mxu0 0.0
        %1455 = vmatpush.msra.mxu0 0.0
        %1456 = vmatpush.msra.mxu0 0.0
        %1457 = vmatpush.msra.mxu0 0.0
        %1458 = vmatpush.msra.mxu0 0.0
        %1459 = vmatpush.msra.mxu0 0.0
        %1460 = vmatpush.msra.mxu0 0.0
        %1461 = vmatpush.msra.mxu0 0.0
        %1462 = vmatpush.msra.mxu0 0.0
        %1463 = vmatpush.msra.mxu0 0.0
        %1464 = vmatpush.msra.mxu0 0.0
        %1465 = vmatpush.msra.mxu0 0.0
        %1466 = vmatpush.msra.mxu0 %v1446
        %1467 = vmatmul.f32.gmra.mxu0 %v1449
        %v1468 = vpop.f32.mrf.mxu0
        %v1469 = vadd.f32 0.0, %v1468
        %1470 = vdwg.mxu0
        %1471 = vrot.lane.b32.xlu0 %v1360, 40
        %v1472 = vpop.permute.xlu0 %1471
        %v1475 = vsel %vm923, %v1444, 0
        %1477 = vmatpush.msra.mxu0 0.0
        %1478 = vmatpush.msra.mxu0 0.0
        %1479 = vmatpush.msra.mxu0 0.0
        %1480 = vmatpush.msra.mxu0 0.0
        %1481 = vmatpush.msra.mxu0 0.0
        %1482 = vmatpush.msra.mxu0 0.0
        %1483 = vmatpush.msra.mxu0 0.0
        %1484 = vmatpush.msra.mxu0 0.0
        %1485 = vmatpush.msra.mxu0 0.0
        %1486 = vmatpush.msra.mxu0 0.0
        %1487 = vmatpush.msra.mxu0 0.0
        %1488 = vmatpush.msra.mxu0 0.0
        %1489 = vmatpush.msra.mxu0 0.0
        %1490 = vmatpush.msra.mxu0 0.0
        %1491 = vmatpush.msra.mxu0 0.0
        %1492 = vmatpush.msra.mxu0 %v1472
        %1493 = vmatmul.f32.gmra.mxu0 %v1475
        %v1494 = vpop.f32.mrf.mxu0
        %v1495 = vadd.f32 0.0, %v1494
        %1496 = vdwg.mxu0
        %1499 = vrot.lane.b32.xlu0 %v1469, 24
        %v1500 = vpop.permute.xlu0 %1499
        %1501 = vrot.lane.b32.xlu0 %v1495, 24
        %v1502 = vpop.permute.xlu0 %1501
        %vm1505 = vcmask 261312
        %1506 = vst.msk [vmem:[#allocation4] sm:$0xff] %vm1505, %v1500
        %1507 = vst.msk [vmem:[#allocation4 + $0x8] sm:$0xff] %vm1505, %v1502
        %v1508 = vld [vmem:[#allocation4] sm:$0xff]
        %v1509 = vld [vmem:[#allocation4 + $0x8] sm:$0xff]
        %v1510 = vld [vmem:[%s783] sm:$0xff]
        %v1511 = vld [vmem:[%s783 + $0x8] sm:$0xff]
        %v1512 = vld [vmem:[%s783 + $0x10] sm:$0xff]
        %v1513 = vld [vmem:[%s783 + $0x18] sm:$0xff]
        %v1514 = vld [vmem:[%s786] sm:$0x1]
        %v1516 = vperm.slane %v1514, 0
        %v1519 = vsel %vm885, %v1508, 0
        %v1522 = vsel %vm885, %v1509, 0
        %1524 = vmatpush.msra.mxu0 0.0
        %1525 = vmatpush.msra.mxu0 0.0
        %1526 = vmatpush.msra.mxu0 0.0
        %1527 = vmatpush.msra.mxu0 0.0
        %1528 = vmatpush.msra.mxu0 0.0
        %1529 = vmatpush.msra.mxu0 0.0
        %1530 = vmatpush.msra.mxu0 0.0
        %1531 = vmatpush.msra.mxu0 0.0
        %1532 = vmatpush.msra.mxu0 0.0
        %1533 = vmatpush.msra.mxu0 0.0
        %1534 = vmatpush.msra.mxu0 0.0
        %1535 = vmatpush.msra.mxu0 0.0
        %1536 = vmatpush.msra.mxu0 %v1513
        %1537 = vmatpush.msra.mxu0 %v1512
        %1538 = vmatpush.msra.mxu0 %v1511
        %1539 = vmatpush.msra.mxu0 %v1510
        %1540 = vmatmul.f32.gmra.mxu0 %v1519
        %v1541 = vpop.f32.mrf.mxu0
        %v1542 = vadd.f32 %v1516, %v1541
        %1543 = vmatmul.f32.gmra.mxu0 %v1522
        %v1544 = vpop.f32.mrf.mxu0
        %v1545 = vadd.f32 %v1516, %v1544
        %1546 = vdwg.mxu0
        %v1547 = vadd.f32 %v873, %v1542
        %v1548 = vadd.f32 %v874, %v1545
        %v1549 = vsel %vm885, %v1547, 0.0
        %1550 = vadd.xlane.f32.xlu0 %v1549
        %v1551 = vpop.xlane.xlu0 %1550
        %v1552 = vsel %vm885, %v1548, 0.0
        %1553 = vadd.xlane.f32.xlu0 %v1552
        %v1554 = vpop.xlane.xlu0 %1553
        %v1555 = vrcp.pop 32.0
        %v1556 = vmul.f32 32.0, %v1555
        %v1557 = vsub.f32 1.0, %v1556
        %v1558 = vmul.f32 %v1555, %v1557
        %v1559 = vadd.f32 %v1555, %v1558
        %vm1560 = vweird.f32 %v1555
        %v1561 = vsel %vm1560, %v1555, %v1559
        %v1562 = vmul.f32 %v1551, %v1561
        %v1563 = vmul.f32 %v1554, %v1561
        %v1564 = vsub.f32 %v1547, %v1562
        %v1565 = vsub.f32 %v1548, %v1563
        %v1566 = vmul.f32 %v1564, %v1564
        %v1567 = vmul.f32 %v1565, %v1565
        %v1568 = vsel %vm885, %v1566, 0.0
        %1569 = vadd.xlane.f32.xlu0 %v1568
        %v1570 = vpop.xlane.xlu0 %1569
        %v1571 = vsel %vm885, %v1567, 0.0
        %1572 = vadd.xlane.f32.xlu0 %v1571
        %v1573 = vpop.xlane.xlu0 %1572
        %v1574 = vmul.f32 %v1570, %v1561
        %v1575 = vmul.f32 %v1573, %v1561
        %v1576 = vadd.f32 %v1574, 1e-05
        %v1577 = vadd.f32 %v1575, 1e-05
        %v1578 = vrsqrt.pop %v1576
        %v1579 = vmul.f32 %v1578, %v1576
        %v1580 = vmul.f32 %v1579, %v1578
        %v1581 = vmul.f32 0.5, %v1580
        %v1582 = vsub.f32 1.5, %v1581
        %v1583 = vmul.f32 %v1578, %v1582
        %vm1584 = vweird.f32 %v1576
        %vm1585 = vweird.f32 %v1578
        %vm1586 = vmor %vm1584, %vm1585
        %v1587 = vsel %vm1586, %v1578, %v1583
        %v1588 = vrsqrt.pop %v1577
        %v1589 = vmul.f32 %v1588, %v1577
        %v1590 = vmul.f32 %v1589, %v1588
        %v1591 = vmul.f32 0.5, %v1590
        %v1592 = vsub.f32 1.5, %v1591
        %v1593 = vmul.f32 %v1588, %v1592
        %vm1594 = vweird.f32 %v1577
        %vm1595 = vweird.f32 %v1588
        %vm1596 = vmor %vm1594, %vm1595
        %v1597 = vsel %vm1596, %v1588, %v1593
        %v1598 = vmul.f32 %v1564, %v1587
        %v1599 = vmul.f32 %v1565, %v1597
        %v1600 = vld [vmem:[%s789] sm:$0x1]
        %v1602 = vperm.slane %v1600, 0
        %v1604 = vmul.f32 %v1598, %v1602
        %v1605 = vmul.f32 %v1599, %v1602
        %v1606 = vld [vmem:[%s792] sm:$0x1]
        %v1608 = vperm.slane %v1606, 0
        %v1610 = vadd.f32 %v1604, %v1608
        %v1611 = vadd.f32 %v1605, %v1608
        %v1612 = vld [vmem:[%s797] sm:$0xff]
        %v1613 = vld [vmem:[%s797 + $0x8] sm:$0xff]
        %v1614 = vld [vmem:[%s797 + $0x10] sm:$0xff]
        %v1615 = vld [vmem:[%s797 + $0x18] sm:$0xff]
        %v1616 = vld [vmem:[%s800] sm:$0x1]
        %v1618 = vperm.slane %v1616, 0
        %v1621 = vsel %vm885, %v1610, 0
        %v1624 = vsel %vm885, %v1611, 0
        %1626 = vmatpush.msra.mxu0 0.0
        %1627 = vmatpush.msra.mxu0 0.0
        %1628 = vmatpush.msra.mxu0 0.0
        %1629 = vmatpush.msra.mxu0 0.0
        %1630 = vmatpush.msra.mxu0 0.0
        %1631 = vmatpush.msra.mxu0 0.0
        %1632 = vmatpush.msra.mxu0 0.0
        %1633 = vmatpush.msra.mxu0 0.0
        %1634 = vmatpush.msra.mxu0 0.0
        %1635 = vmatpush.msra.mxu0 0.0
        %1636 = vmatpush.msra.mxu0 0.0
        %1637 = vmatpush.msra.mxu0 0.0
        %1638 = vmatpush.msra.mxu0 %v1615
        %1639 = vmatpush.msra.mxu0 %v1614
        %1640 = vmatpush.msra.mxu0 %v1613
        %1641 = vmatpush.msra.mxu0 %v1612
        %1642 = vmatmul.f32.gmra.mxu0 %v1621
        %v1643 = vpop.f32.mrf.mxu0
        %v1644 = vadd.f32 %v1618, %v1643
        %1645 = vmatmul.f32.gmra.mxu0 %v1624
        %v1646 = vpop.f32.mrf.mxu0
        %v1647 = vadd.f32 %v1618, %v1646
        %1648 = vdwg.mxu0
        %v1649 = vmax.f32 %v1644, 0.0
        %v1650 = vmax.f32 %v1647, 0.0
        %v1651 = vld [vmem:[%s805] sm:$0xff]
        %v1652 = vld [vmem:[%s805 + $0x8] sm:$0xff]
        %v1653 = vld [vmem:[%s805 + $0x10] sm:$0xff]
        %v1654 = vld [vmem:[%s805 + $0x18] sm:$0xff]
        %v1655 = vld [vmem:[%s805 + $0x20] sm:$0xff]
        %v1656 = vld [vmem:[%s805 + $0x28] sm:$0xff]
        %v1657 = vld [vmem:[%s805 + $0x30] sm:$0xff]
        %v1658 = vld [vmem:[%s805 + $0x38] sm:$0xff]
        %v1659 = vld [vmem:[%s805 + $0x40] sm:$0xff]
        %v1660 = vld [vmem:[%s805 + $0x48] sm:$0xff]
        %v1661 = vld [vmem:[%s805 + $0x50] sm:$0xff]
        %v1662 = vld [vmem:[%s805 + $0x58] sm:$0xff]
        %v1663 = vld [vmem:[%s805 + $0x60] sm:$0xff]
        %v1664 = vld [vmem:[%s805 + $0x68] sm:$0xff]
        %v1665 = vld [vmem:[%s805 + $0x70] sm:$0xff]
        %v1666 = vld [vmem:[%s805 + $0x78] sm:$0xff]
        %v1667 = vld [vmem:[%s808] sm:$0x1]
        %v1669 = vperm.slane %v1667, 0
        %1671 = vmatpush.msra.mxu0 %v1666
        %1672 = vmatpush.msra.mxu0 %v1665
        %1673 = vmatpush.msra.mxu0 %v1664
        %1674 = vmatpush.msra.mxu0 %v1663
        %1675 = vmatpush.msra.mxu0 %v1662
        %1676 = vmatpush.msra.mxu0 %v1661
        %1677 = vmatpush.msra.mxu0 %v1660
        %1678 = vmatpush.msra.mxu0 %v1659
        %1679 = vmatpush.msra.mxu0 %v1658
        %1680 = vmatpush.msra.mxu0 %v1657
        %1681 = vmatpush.msra.mxu0 %v1656
        %1682 = vmatpush.msra.mxu0 %v1655
        %1683 = vmatpush.msra.mxu0 %v1654
        %1684 = vmatpush.msra.mxu0 %v1653
        %1685 = vmatpush.msra.mxu0 %v1652
        %1686 = vmatpush.msra.mxu0 %v1651
        %1687 = vmatmul.f32.gmra.mxu0 %v1649
        %v1688 = vpop.f32.mrf.mxu0
        %v1689 = vadd.f32 %v1669, %v1688
        %1690 = vmatmul.f32.gmra.mxu0 %v1650
        %v1691 = vpop.f32.mrf.mxu0
        %v1692 = vadd.f32 %v1669, %v1691
        %1693 = vdwg.mxu0
        %v1694 = vadd.f32 %v1610, %v1689
        %v1695 = vadd.f32 %v1611, %v1692
        %v1696 = vsel %vm885, %v1694, 0.0
        %1697 = vadd.xlane.f32.xlu0 %v1696
        %v1698 = vpop.xlane.xlu0 %1697
        %v1699 = vsel %vm885, %v1695, 0.0
        %1700 = vadd.xlane.f32.xlu0 %v1699
        %v1701 = vpop.xlane.xlu0 %1700
        %v1702 = vmul.f32 %v1698, %v1561
        %v1703 = vmul.f32 %v1701, %v1561
        %v1704 = vsub.f32 %v1694, %v1702
        %v1705 = vsub.f32 %v1695, %v1703
        %v1706 = vmul.f32 %v1704, %v1704
        %v1707 = vmul.f32 %v1705, %v1705
        %v1708 = vsel %vm885, %v1706, 0.0
        %1709 = vadd.xlane.f32.xlu0 %v1708
        %v1710 = vpop.xlane.xlu0 %1709
        %v1711 = vsel %vm885, %v1707, 0.0
        %1712 = vadd.xlane.f32.xlu0 %v1711
        %v1713 = vpop.xlane.xlu0 %1712
        %v1714 = vmul.f32 %v1710, %v1561
        %v1715 = vmul.f32 %v1713, %v1561
        %v1716 = vadd.f32 %v1714, 1e-05
        %v1717 = vadd.f32 %v1715, 1e-05
        %v1718 = vrsqrt.pop %v1716
        %v1719 = vmul.f32 %v1718, %v1716
        %v1720 = vmul.f32 %v1719, %v1718
        %v1721 = vmul.f32 0.5, %v1720
        %v1722 = vsub.f32 1.5, %v1721
        %v1723 = vmul.f32 %v1718, %v1722
        %vm1724 = vweird.f32 %v1716
        %vm1725 = vweird.f32 %v1718
        %vm1726 = vmor %vm1724, %vm1725
        %v1727 = vsel %vm1726, %v1718, %v1723
        %v1728 = vrsqrt.pop %v1717
        %v1729 = vmul.f32 %v1728, %v1717
        %v1730 = vmul.f32 %v1729, %v1728
        %v1731 = vmul.f32 0.5, %v1730
        %v1732 = vsub.f32 1.5, %v1731
        %v1733 = vmul.f32 %v1728, %v1732
        %vm1734 = vweird.f32 %v1717
        %vm1735 = vweird.f32 %v1728
        %vm1736 = vmor %vm1734, %vm1735
        %v1737 = vsel %vm1736, %v1728, %v1733
        %v1738 = vmul.f32 %v1704, %v1727
        %v1739 = vmul.f32 %v1705, %v1737
        %v1740 = vld [vmem:[%s811] sm:$0x1]
        %v1742 = vperm.slane %v1740, 0
        %v1744 = vmul.f32 %v1738, %v1742
        %v1745 = vmul.f32 %v1739, %v1742
        %v1746 = vld [vmem:[%s814] sm:$0x1]
        %v1748 = vperm.slane %v1746, 0
        %v1750 = vadd.f32 %v1744, %v1748
        %v1751 = vadd.f32 %v1745, %v1748
        %1752 = vst.msk [vmem:[#allocation2] sm:$0xff] %vm885, %v1750
        %1753 = vst.msk [vmem:[#allocation2 + $0x8] sm:$0xff] %vm885, %v1751
        %p1754 = scmp.eq.s32.totalorder %s33, 1
        // Predicated region
        $region109: #{tpu_custom_call.1} parent=103 // pred_check
          %p1755 = pneg %p1754
        $region110: #{tpu_custom_call.1} parent=103 // pred_check_branch
          %1757 = sbr.rel (%p1755) target = $region112
        $region111: #{tpu_custom_call.1} parent=103 // pred_region
          %v1758 = vld [vmem:[%s19] sm:$0xff]
          %v1759 = vld [vmem:[%s19 + $0x8] sm:$0xff]
          %v1760 = vld [vmem:[%s19 + $0x10] sm:$0xff]
          %v1761 = vld [vmem:[%s19 + $0x18] sm:$0xff]
          %v1762 = vld [vmem:[%s20] sm:$0x1]
          %v1764 = vperm.slane %v1762, 0
          %v1767 = vsel %vm885, %v1750, 0
          %v1770 = vsel %vm885, %v1751, 0
          %1772 = vmatpush.msra.mxu0 0.0
          %1773 = vmatpush.msra.mxu0 0.0
          %1774 = vmatpush.msra.mxu0 0.0
          %1775 = vmatpush.msra.mxu0 0.0
          %1776 = vmatpush.msra.mxu0 0.0
          %1777 = vmatpush.msra.mxu0 0.0
          %1778 = vmatpush.msra.mxu0 0.0
          %1779 = vmatpush.msra.mxu0 0.0
          %1780 = vmatpush.msra.mxu0 0.0
          %1781 = vmatpush.msra.mxu0 0.0
          %1782 = vmatpush.msra.mxu0 0.0
          %1783 = vmatpush.msra.mxu0 0.0
          %1784 = vmatpush.msra.mxu0 %v1761
          %1785 = vmatpush.msra.mxu0 %v1760
          %1786 = vmatpush.msra.mxu0 %v1759
          %1787 = vmatpush.msra.mxu0 %v1758
          %1788 = vmatmul.f32.gmra.mxu0 %v1767
          %v1789 = vpop.f32.mrf.mxu0
          %v1790 = vadd.f32 %v1764, %v1789
          %1791 = vmatmul.f32.gmra.mxu0 %v1770
          %v1792 = vpop.f32.mrf.mxu0
          %v1793 = vadd.f32 %v1764, %v1792
          %1794 = vdwg.mxu0
          %1795 = vst [vmem:[#allocation5] sm:$0xff] %v1790
          %1796 = vst [vmem:[#allocation5 + $0x8] sm:$0xff] %v1793
        $region112: #{tpu_custom_call.1} parent=103 // pred_fallthru
          _
        // Predicated region
        $region113: #{tpu_custom_call.1} parent=103 // pred_check
          %p1797 = pneg %p547
        $region114: #{tpu_custom_call.1} parent=103 // pred_check_branch
          %1799 = sbr.rel (%p1797) target = $region116
        $region115: #{tpu_custom_call.1} parent=103 // pred_region
          %1801 = vsyncadd [#allocation6], 0
          %s1802 = sshll.u32 [#allocation5], 4
          %s1803 = int_to_ptr.vmem [resolvable:$true] %s1802
          %s1804 = sshll.u32 %s21, 4
          %s1805 = int_to_ptr.hbm [resolvable:$true] %s1804
          %1810 = dma.vmem_to_hbm [thread:$0]  %s1803, 256, %s1805, [#allocation6], 128, 128, 8
        $region116: #{tpu_custom_call.1} parent=103 // pred_fallthru
          _
        // Predicated region
        $region117: #{tpu_custom_call.1} parent=103 // pred_check
          %p1811 = pneg %p547
        $region118: #{tpu_custom_call.1} parent=103 // pred_check_branch
          %1813 = sbr.rel (%p1811) target = $region120
        $region119: #{tpu_custom_call.1} parent=103 // pred_region
          %1815 = dma.done [#allocation6], 256
        $region120: #{tpu_custom_call.1} parent=103 // pred_fallthru
          _
      $region104: #{tpu_custom_call.1} parent=5 // pred_fallthru
        _
      %p1816 = scmp.le.s32.totalorder 2, %s28
      // Predicated region
      $region121: #{tpu_custom_call.1} parent=5 // pred_check
        %p1817 = pneg %p1816
      $region122: #{tpu_custom_call.1} parent=5 // pred_check_branch
        %1819 = sbr.rel (%p1817) target = $region124
      $region123: #{tpu_custom_call.1} parent=5 // pred_region
        %s1820 = ssub.s32 %s28, 2
      $region124: #{tpu_custom_call.1} parent=5 // pred_fallthru
        _
    $region6: #{tpu_custom_call.1} parent=1 // loop_footer
      %s32 = sadd.s32 1, %s28
    $region7: #{tpu_custom_call.1} parent=1 // loop_footer_branch
      %27 = sbr.rel target = $region3
    $region8: #{tpu_custom_call.1} parent=1 // loop_exit
      _
    %1821 = vsyncpa [#allocation6], 1
    %s1822 = scalar_lea.sflag [#allocation6], 1
    %1823 = vsyncpa %s1822, 1

</llo_original>
